<compile_context>
chip_gen: v6e
topology: v6e:2x2x1
jax: 0.10.0
libtpu: 0.0.40
codegen_flags: <defaults>
</compile_context>

<pallas_src>
import functools

import jax
import jax.numpy as jnp
from jax.experimental import pallas as pl
from jax.experimental.pallas import tpu as pltpu


def _mean_conv_kernel(x_ref, w_ref, b_ref, o_ref, *, inv_hw):
    # x_ref: [Cin, HW]  (one batch; batch dim squeezed by the BlockSpec)
    # w_ref: [Cout, Cin]   b_ref: [1, Cout]   o_ref: [1, Cout]
    w = w_ref[...].astype(jnp.float32)
    x = x_ref[...].astype(jnp.float32)
    # Heavy contraction (K = Cin = 2304) on the MXU; result [Cout, HW] is tiny.
    p = jnp.dot(w, x, preferred_element_type=jnp.float32)          # [Cout, HW]
    # Small lane reduce over HW (96 x 49), then place the 96-element result
    # as a single lane-dense row and fold in 1/HW + bias.
    s = jnp.sum(p, axis=-1)                                        # [Cout]
    y = s.reshape(1, -1) * inv_hw + b_ref[...].astype(jnp.float32)  # [1, Cout]
    o_ref[...] = y.astype(o_ref.dtype)


def mean_conv2d_1x1(x_nchw, weight, bias):
    """x_nchw: [N, Cin, H, W]; weight: [Cout, Cin, 1, 1]; bias: [Cout].
    Returns [N, Cout, 1, 1] (matches PyTorch M.forward)."""
    N, Cin, H, W = x_nchw.shape
    Cout = weight.shape[0]
    HW = H * W

    x_flat = x_nchw.reshape(N, Cin, HW)        # free reshape (row-major NCHW)
    w_mat = weight.reshape(Cout, Cin)          # natural layout, NO transpose
    b_row = bias.reshape(1, Cout)              # lane-dense bias row

    kernel = functools.partial(_mean_conv_kernel, inv_hw=1.0 / HW)

    itemsize = jnp.dtype(x_nchw.dtype).itemsize
    bytes_accessed = (
        x_flat.size * itemsize            # activations
        + w_mat.size * jnp.dtype(w_mat.dtype).itemsize   # weights
        + b_row.size * jnp.dtype(b_row.dtype).itemsize   # bias
        + N * Cout * itemsize             # output
    )

    out = pl.pallas_call(
        kernel,
        out_shape=jax.ShapeDtypeStruct((N, Cout), x_nchw.dtype),
        grid_spec=pltpu.PrefetchScalarGridSpec(
            num_scalar_prefetch=0,
            grid=(N,),
            in_specs=[
                pl.BlockSpec((pl.Squeezed(), Cin, HW), lambda n: (n, 0, 0)),
                pl.BlockSpec((Cout, Cin), lambda n: (0, 0)),
                pl.BlockSpec((1, Cout), lambda n: (0, 0)),
            ],
            out_specs=pl.BlockSpec((1, Cout), lambda n: (n, 0)),
        ),
        compiler_params=pltpu.CompilerParams(
            dimension_semantics=("parallel",),   # batch axis is independent
        ),
        cost_estimate=pl.CostEstimate(
            flops=2 * N * Cout * Cin * HW,
            transcendentals=0,
            bytes_accessed=int(bytes_accessed),
        ),
    )(x_flat, w_mat, b_row)

    # [N, Cout] -> [N, Cout, 1, 1]; pure reshape, no transpose.
    return out.reshape(N, Cout, 1, 1)


if __name__ == "__main__":
    key = jax.random.PRNGKey(0)
    k_x, k_w, k_b = jax.random.split(key, 3)

    # Shapes implied by the module's forward.
    N, Cin, H, W = 1, 2304, 7, 7
    Cout = 96

    x = jax.random.normal(k_x, (N, Cin, H, W), dtype=jnp.float32)
    weight = jax.random.normal(k_w, (Cout, Cin, 1, 1), dtype=jnp.float32) * 0.02
    bias = jax.random.normal(k_b, (Cout,), dtype=jnp.float32) * 0.02

    out = mean_conv2d_1x1(x, weight, bias)
    out = jax.block_until_ready(out)

    # Reference check in plain JAX.
    ref = jnp.mean(x, axis=(2, 3))                      # [N, Cin]
    ref = ref @ weight.reshape(Cout, Cin).T + bias      # [N, Cout]
    ref = ref.reshape(N, Cout, 1, 1)
    assert out.shape == (N, Cout, 1, 1)
    assert jnp.allclose(out, ref, atol=1e-4, rtol=1e-4)

    print("KERNEL_OK")
</pallas_src>

<mosaic_0001>
module attributes {stable_mosaic.version = 11 : i64} {
  func.func @_mean_conv_kernel(%arg0: i32, %arg1: memref<1x2304x49xf32, #tpu.memory_space<vmem>>, %arg2: memref<96x2304xf32, #tpu.memory_space<vmem>>, %arg3: memref<1x96xf32, #tpu.memory_space<vmem>>, %arg4: memref<1x96xf32, #tpu.memory_space<vmem>>) attributes {dimension_semantics = [#tpu.dimension_semantics<parallel>], iteration_bounds = array<i64: 1>, scalar_prefetch = 0 : i64, scratch_operands = 0 : i64, tpu.core_type = #tpu.core_type<tc>, window_params = [{transform_indices = @transform_0, window_bounds = array<i64: 1, 2304, 49>}, {pipeline_mode = #tpu.pipeline_mode<synchronous>, transform_indices = @transform_1, window_bounds = array<i64: 96, 2304>}, {pipeline_mode = #tpu.pipeline_mode<synchronous>, transform_indices = @transform_2, window_bounds = array<i64: 1, 96>}, {transform_indices = @transform_3, window_bounds = array<i64: 1, 96>}]} {
    %c0 = arith.constant 0 : index
    %c0_0 = arith.constant 0 : index
    %0 = vector.load %arg2[%c0, %c0_0] : memref<96x2304xf32, #tpu.memory_space<vmem>>, vector<96x2304xf32>
    %c0_1 = arith.constant 0 : index
    %c0_2 = arith.constant 0 : index
    %c0_3 = arith.constant 0 : index
    %1 = vector.load %arg1[%c0_1, %c0_2, %c0_3] : memref<1x2304x49xf32, #tpu.memory_space<vmem>>, vector<1x2304x49xf32>
    %2 = vector.shape_cast %1 : vector<1x2304x49xf32> to vector<2304x49xf32>
    %cst = arith.constant dense<0.000000e+00> : vector<96x49xf32>
    %3 = tpu.matmul %0, %2, %cst {dimension_numbers = #tpu.dot_dimension_numbers<[1], [0], [0], [1], [0, 0, 1, 1], [], []>} : vector<96x2304xf32>, vector<2304x49xf32>, vector<96x49xf32> -> vector<96x49xf32>
    %cst_4 = arith.constant dense<0.000000e+00> : vector<96xf32>
    %4 = vector.multi_reduction <add>, %3, %cst_4 [1] : vector<96x49xf32> to vector<96xf32>
    %5 = vector.shape_cast %4 : vector<96xf32> to vector<1x96xf32>
    %cst_5 = arith.constant 0.0204081628 : f32
    %6 = vector.broadcast %cst_5 : f32 to vector<1x96xf32>
    %7 = arith.mulf %5, %6 : vector<1x96xf32>
    %c0_6 = arith.constant 0 : index
    %c0_7 = arith.constant 0 : index
    %8 = vector.load %arg3[%c0_6, %c0_7] : memref<1x96xf32, #tpu.memory_space<vmem>>, vector<1x96xf32>
    %9 = arith.addf %7, %8 : vector<1x96xf32>
    %c0_8 = arith.constant 0 : index
    %c0_9 = arith.constant 0 : index
    %10 = vector.load %arg4[%c0_8, %c0_9] : memref<1x96xf32, #tpu.memory_space<vmem>>, vector<1x96xf32>
    tpu.vector_store %arg4[%c0_8, %c0_9], %9 {strides = array<i32>} : memref<1x96xf32, #tpu.memory_space<vmem>>, vector<1x96xf32>,
    return
  }
  func.func @transform_0(%arg0: i32) -> (i32, i32, i32) {
    %c0_i32 = arith.constant 0 : i32
    %c0_i32_0 = arith.constant 0 : i32
    %c0_i32_1 = arith.constant 0 : i32
    return %arg0, %c0_i32, %c0_i32_0 : i32, i32, i32
  }
  func.func @transform_1(%arg0: i32) -> (i32, i32) {
    %c0_i32 = arith.constant 0 : i32
    %c0_i32_0 = arith.constant 0 : i32
    %c0_i32_1 = arith.constant 0 : i32
    return %c0_i32, %c0_i32_0 : i32, i32
  }
  func.func @transform_2(%arg0: i32) -> (i32, i32) {
    %c0_i32 = arith.constant 0 : i32
    %c0_i32_0 = arith.constant 0 : i32
    %c0_i32_1 = arith.constant 0 : i32
    return %c0_i32, %c0_i32_0 : i32, i32
  }
  func.func @transform_3(%arg0: i32) -> (i32, i32) {
    %c0_i32 = arith.constant 0 : i32
    %c0_i32_0 = arith.constant 0 : i32
    return %arg0, %c0_i32 : i32, i32
  }
}

</mosaic_0001>

<llo_original>
// kernel: tpu_custom_call.1
$region0: #{tpu_custom_call.1}
  #allocation0 [shape = 'u32[]', space=smem, size = 0x4, offset = 0x4, fixed_abs, tag = 'smem constant byte address 0x4 - core index']
  #allocation1 [shape = 'u32[144,128]{1,0:T(1,128)}', space=vmem, size = 0x12000, scoped, tag = 'internal scratch']
  %s0 = inlined_call_operand.vmem [shape: f32[1,2304,49], index: 0, kind: input, shape index: {}]
  %s1 = inlined_call_operand.vmem [shape: f32[96,2304], index: 1, kind: input, shape index: {}]
  %s2 = inlined_call_operand.vmem [shape: f32[1,96], index: 2, kind: input, shape index: {}]
  %s3 = inlined_call_operand.hbm [shape: f32[1,96], index: 3, kind: output, shape index: {}]
  %s4 = sld [smem:[#allocation0]]
  $region22: #{tpu_custom_call.1} parent=0
    _
  %s6 = ssub.s32 1, %s4
  %s7 = scalar_select 0, %s6, %s4
  $region1: #{tpu_custom_call.1} parent=0
    #allocation2 [shape = 'u8[512]{0}', space=vmem, size = 0x400, scoped, tag = 'output window, operand 0, single buffered']
    #allocation3 [shape = 's32[1]{0}', space=sflag, size = 0x4, scoped, tag = 'scoped memory for tpu_custom_call.1']
    %8 = vsyncpa [#allocation3], 0
    // Predicated region
    $region2: #{tpu_custom_call.1} parent=1 // pred_check
      _
    $region3: #{tpu_custom_call.1} parent=1 // pred_check_branch
      %10 = sbr.rel (0) target = $region5
    $region4: #{tpu_custom_call.1} parent=1 // pred_region
      _
    $region5: #{tpu_custom_call.1} parent=1 // pred_fallthru
      _
    // Predicated region
    $region6: #{tpu_custom_call.1} parent=1 // pred_check
      _
    $region7: #{tpu_custom_call.1} parent=1 // pred_check_branch
      %12 = sbr.rel (0) target = $region9
    $region8: #{tpu_custom_call.1} parent=1 // pred_region
      _
    $region9: #{tpu_custom_call.1} parent=1 // pred_fallthru
      _
    // Predicated region
    $region10: #{tpu_custom_call.1} parent=1 // pred_check
      _
    $region11: #{tpu_custom_call.1} parent=1 // pred_check_branch
      %14 = sbr.rel (0) target = $region13
    $region12: #{tpu_custom_call.1} parent=1 // pred_region
      _
    $region13: #{tpu_custom_call.1} parent=1 // pred_fallthru
      _
    %v15 = vld [vmem:[%s1] sm:$0xff]
    %v16 = vld [vmem:[%s1 + $0x8] sm:$0xff]
    %v17 = vld [vmem:[%s1 + $0x10] sm:$0xff]
    %v18 = vld [vmem:[%s1 + $0x18] sm:$0xff]
    %v19 = vld [vmem:[%s1 + $0x20] sm:$0xff]
    %v20 = vld [vmem:[%s1 + $0x28] sm:$0xff]
    %v21 = vld [vmem:[%s1 + $0x30] sm:$0xff]
    %v22 = vld [vmem:[%s1 + $0x38] sm:$0xff]
    %v23 = vld [vmem:[%s1 + $0x40] sm:$0xff]
    %v24 = vld [vmem:[%s1 + $0x48] sm:$0xff]
    %v25 = vld [vmem:[%s1 + $0x50] sm:$0xff]
    %v26 = vld [vmem:[%s1 + $0x58] sm:$0xff]
    %v27 = vld [vmem:[%s1 + $0x60] sm:$0xff]
    %v28 = vld [vmem:[%s1 + $0x68] sm:$0xff]
    %v29 = vld [vmem:[%s1 + $0x70] sm:$0xff]
    %v30 = vld [vmem:[%s1 + $0x78] sm:$0xff]
    %v31 = vld [vmem:[%s1 + $0x80] sm:$0xff]
    %v32 = vld [vmem:[%s1 + $0x88] sm:$0xff]
    %v33 = vld [vmem:[%s1 + $0x90] sm:$0xff]
    %v34 = vld [vmem:[%s1 + $0x98] sm:$0xff]
    %v35 = vld [vmem:[%s1 + $0xa0] sm:$0xff]
    %v36 = vld [vmem:[%s1 + $0xa8] sm:$0xff]
    %v37 = vld [vmem:[%s1 + $0xb0] sm:$0xff]
    %v38 = vld [vmem:[%s1 + $0xb8] sm:$0xff]
    %v39 = vld [vmem:[%s1 + $0xc0] sm:$0xff]
    %v40 = vld [vmem:[%s1 + $0xc8] sm:$0xff]
    %v41 = vld [vmem:[%s1 + $0xd0] sm:$0xff]
    %v42 = vld [vmem:[%s1 + $0xd8] sm:$0xff]
    %v43 = vld [vmem:[%s1 + $0xe0] sm:$0xff]
    %v44 = vld [vmem:[%s1 + $0xe8] sm:$0xff]
    %v45 = vld [vmem:[%s1 + $0xf0] sm:$0xff]
    %v46 = vld [vmem:[%s1 + $0xf8] sm:$0xff]
    %v47 = vld [vmem:[%s1 + $0x100] sm:$0xff]
    %v48 = vld [vmem:[%s1 + $0x108] sm:$0xff]
    %v49 = vld [vmem:[%s1 + $0x110] sm:$0xff]
    %v50 = vld [vmem:[%s1 + $0x118] sm:$0xff]
    %v51 = vld [vmem:[%s1 + $0x120] sm:$0xff]
    %v52 = vld [vmem:[%s1 + $0x128] sm:$0xff]
    %v53 = vld [vmem:[%s1 + $0x130] sm:$0xff]
    %v54 = vld [vmem:[%s1 + $0x138] sm:$0xff]
    %v55 = vld [vmem:[%s1 + $0x140] sm:$0xff]
    %v56 = vld [vmem:[%s1 + $0x148] sm:$0xff]
    %v57 = vld [vmem:[%s1 + $0x150] sm:$0xff]
    %v58 = vld [vmem:[%s1 + $0x158] sm:$0xff]
    %v59 = vld [vmem:[%s1 + $0x160] sm:$0xff]
    %v60 = vld [vmem:[%s1 + $0x168] sm:$0xff]
    %v61 = vld [vmem:[%s1 + $0x170] sm:$0xff]
    %v62 = vld [vmem:[%s1 + $0x178] sm:$0xff]
    %v63 = vld [vmem:[%s1 + $0x180] sm:$0xff]
    %v64 = vld [vmem:[%s1 + $0x188] sm:$0xff]
    %v65 = vld [vmem:[%s1 + $0x190] sm:$0xff]
    %v66 = vld [vmem:[%s1 + $0x198] sm:$0xff]
    %v67 = vld [vmem:[%s1 + $0x1a0] sm:$0xff]
    %v68 = vld [vmem:[%s1 + $0x1a8] sm:$0xff]
    %v69 = vld [vmem:[%s1 + $0x1b0] sm:$0xff]
    %v70 = vld [vmem:[%s1 + $0x1b8] sm:$0xff]
    %v71 = vld [vmem:[%s1 + $0x1c0] sm:$0xff]
    %v72 = vld [vmem:[%s1 + $0x1c8] sm:$0xff]
    %v73 = vld [vmem:[%s1 + $0x1d0] sm:$0xff]
    %v74 = vld [vmem:[%s1 + $0x1d8] sm:$0xff]
    %v75 = vld [vmem:[%s1 + $0x1e0] sm:$0xff]
    %v76 = vld [vmem:[%s1 + $0x1e8] sm:$0xff]
    %v77 = vld [vmem:[%s1 + $0x1f0] sm:$0xff]
    %v78 = vld [vmem:[%s1 + $0x1f8] sm:$0xff]
    %v79 = vld [vmem:[%s1 + $0x200] sm:$0xff]
    %v80 = vld [vmem:[%s1 + $0x208] sm:$0xff]
    %v81 = vld [vmem:[%s1 + $0x210] sm:$0xff]
    %v82 = vld [vmem:[%s1 + $0x218] sm:$0xff]
    %v83 = vld [vmem:[%s1 + $0x220] sm:$0xff]
    %v84 = vld [vmem:[%s1 + $0x228] sm:$0xff]
    %v85 = vld [vmem:[%s1 + $0x230] sm:$0xff]
    %v86 = vld [vmem:[%s1 + $0x238] sm:$0xff]
    %v87 = vld [vmem:[%s1 + $0x240] sm:$0xff]
    %v88 = vld [vmem:[%s1 + $0x248] sm:$0xff]
    %v89 = vld [vmem:[%s1 + $0x250] sm:$0xff]
    %v90 = vld [vmem:[%s1 + $0x258] sm:$0xff]
    %v91 = vld [vmem:[%s1 + $0x260] sm:$0xff]
    %v92 = vld [vmem:[%s1 + $0x268] sm:$0xff]
    %v93 = vld [vmem:[%s1 + $0x270] sm:$0xff]
    %v94 = vld [vmem:[%s1 + $0x278] sm:$0xff]
    %v95 = vld [vmem:[%s1 + $0x280] sm:$0xff]
    %v96 = vld [vmem:[%s1 + $0x288] sm:$0xff]
    %v97 = vld [vmem:[%s1 + $0x290] sm:$0xff]
    %v98 = vld [vmem:[%s1 + $0x298] sm:$0xff]
    %v99 = vld [vmem:[%s1 + $0x2a0] sm:$0xff]
    %v100 = vld [vmem:[%s1 + $0x2a8] sm:$0xff]
    %v101 = vld [vmem:[%s1 + $0x2b0] sm:$0xff]
    %v102 = vld [vmem:[%s1 + $0x2b8] sm:$0xff]
    %v103 = vld [vmem:[%s1 + $0x2c0] sm:$0xff]
    %v104 = vld [vmem:[%s1 + $0x2c8] sm:$0xff]
    %v105 = vld [vmem:[%s1 + $0x2d0] sm:$0xff]
    %v106 = vld [vmem:[%s1 + $0x2d8] sm:$0xff]
    %v107 = vld [vmem:[%s1 + $0x2e0] sm:$0xff]
    %v108 = vld [vmem:[%s1 + $0x2e8] sm:$0xff]
    %v109 = vld [vmem:[%s1 + $0x2f0] sm:$0xff]
    %v110 = vld [vmem:[%s1 + $0x2f8] sm:$0xff]
    %v111 = vld [vmem:[%s1 + $0x300] sm:$0xff]
    %v112 = vld [vmem:[%s1 + $0x308] sm:$0xff]
    %v113 = vld [vmem:[%s1 + $0x310] sm:$0xff]
    %v114 = vld [vmem:[%s1 + $0x318] sm:$0xff]
    %v115 = vld [vmem:[%s1 + $0x320] sm:$0xff]
    %v116 = vld [vmem:[%s1 + $0x328] sm:$0xff]
    %v117 = vld [vmem:[%s1 + $0x330] sm:$0xff]
    %v118 = vld [vmem:[%s1 + $0x338] sm:$0xff]
    %v119 = vld [vmem:[%s1 + $0x340] sm:$0xff]
    %v120 = vld [vmem:[%s1 + $0x348] sm:$0xff]
    %v121 = vld [vmem:[%s1 + $0x350] sm:$0xff]
    %v122 = vld [vmem:[%s1 + $0x358] sm:$0xff]
    %v123 = vld [vmem:[%s1 + $0x360] sm:$0xff]
    %v124 = vld [vmem:[%s1 + $0x368] sm:$0xff]
    %v125 = vld [vmem:[%s1 + $0x370] sm:$0xff]
    %v126 = vld [vmem:[%s1 + $0x378] sm:$0xff]
    %v127 = vld [vmem:[%s1 + $0x380] sm:$0xff]
    %v128 = vld [vmem:[%s1 + $0x388] sm:$0xff]
    %v129 = vld [vmem:[%s1 + $0x390] sm:$0xff]
    %v130 = vld [vmem:[%s1 + $0x398] sm:$0xff]
    %v131 = vld [vmem:[%s1 + $0x3a0] sm:$0xff]
    %v132 = vld [vmem:[%s1 + $0x3a8] sm:$0xff]
    %v133 = vld [vmem:[%s1 + $0x3b0] sm:$0xff]
    %v134 = vld [vmem:[%s1 + $0x3b8] sm:$0xff]
    %v135 = vld [vmem:[%s1 + $0x3c0] sm:$0xff]
    %v136 = vld [vmem:[%s1 + $0x3c8] sm:$0xff]
    %v137 = vld [vmem:[%s1 + $0x3d0] sm:$0xff]
    %v138 = vld [vmem:[%s1 + $0x3d8] sm:$0xff]
    %v139 = vld [vmem:[%s1 + $0x3e0] sm:$0xff]
    %v140 = vld [vmem:[%s1 + $0x3e8] sm:$0xff]
    %v141 = vld [vmem:[%s1 + $0x3f0] sm:$0xff]
    %v142 = vld [vmem:[%s1 + $0x3f8] sm:$0xff]
    %v143 = vld [vmem:[%s1 + $0x400] sm:$0xff]
    %v144 = vld [vmem:[%s1 + $0x408] sm:$0xff]
    %v145 = vld [vmem:[%s1 + $0x410] sm:$0xff]
    %v146 = vld [vmem:[%s1 + $0x418] sm:$0xff]
    %v147 = vld [vmem:[%s1 + $0x420] sm:$0xff]
    %v148 = vld [vmem:[%s1 + $0x428] sm:$0xff]
    %v149 = vld [vmem:[%s1 + $0x430] sm:$0xff]
    %v150 = vld [vmem:[%s1 + $0x438] sm:$0xff]
    %v151 = vld [vmem:[%s1 + $0x440] sm:$0xff]
    %v152 = vld [vmem:[%s1 + $0x448] sm:$0xff]
    %v153 = vld [vmem:[%s1 + $0x450] sm:$0xff]
    %v154 = vld [vmem:[%s1 + $0x458] sm:$0xff]
    %v155 = vld [vmem:[%s1 + $0x460] sm:$0xff]
    %v156 = vld [vmem:[%s1 + $0x468] sm:$0xff]
    %v157 = vld [vmem:[%s1 + $0x470] sm:$0xff]
    %v158 = vld [vmem:[%s1 + $0x478] sm:$0xff]
    %v159 = vld [vmem:[%s1 + $0x480] sm:$0xff]
    %v160 = vld [vmem:[%s1 + $0x488] sm:$0xff]
    %v161 = vld [vmem:[%s1 + $0x490] sm:$0xff]
    %v162 = vld [vmem:[%s1 + $0x498] sm:$0xff]
    %v163 = vld [vmem:[%s1 + $0x4a0] sm:$0xff]
    %v164 = vld [vmem:[%s1 + $0x4a8] sm:$0xff]
    %v165 = vld [vmem:[%s1 + $0x4b0] sm:$0xff]
    %v166 = vld [vmem:[%s1 + $0x4b8] sm:$0xff]
    %v167 = vld [vmem:[%s1 + $0x4c0] sm:$0xff]
    %v168 = vld [vmem:[%s1 + $0x4c8] sm:$0xff]
    %v169 = vld [vmem:[%s1 + $0x4d0] sm:$0xff]
    %v170 = vld [vmem:[%s1 + $0x4d8] sm:$0xff]
    %v171 = vld [vmem:[%s1 + $0x4e0] sm:$0xff]
    %v172 = vld [vmem:[%s1 + $0x4e8] sm:$0xff]
    %v173 = vld [vmem:[%s1 + $0x4f0] sm:$0xff]
    %v174 = vld [vmem:[%s1 + $0x4f8] sm:$0xff]
    %v175 = vld [vmem:[%s1 + $0x500] sm:$0xff]
    %v176 = vld [vmem:[%s1 + $0x508] sm:$0xff]
    %v177 = vld [vmem:[%s1 + $0x510] sm:$0xff]
    %v178 = vld [vmem:[%s1 + $0x518] sm:$0xff]
    %v179 = vld [vmem:[%s1 + $0x520] sm:$0xff]
    %v180 = vld [vmem:[%s1 + $0x528] sm:$0xff]
    %v181 = vld [vmem:[%s1 + $0x530] sm:$0xff]
    %v182 = vld [vmem:[%s1 + $0x538] sm:$0xff]
    %v183 = vld [vmem:[%s1 + $0x540] sm:$0xff]
    %v184 = vld [vmem:[%s1 + $0x548] sm:$0xff]
    %v185 = vld [vmem:[%s1 + $0x550] sm:$0xff]
    %v186 = vld [vmem:[%s1 + $0x558] sm:$0xff]
    %v187 = vld [vmem:[%s1 + $0x560] sm:$0xff]
    %v188 = vld [vmem:[%s1 + $0x568] sm:$0xff]
    %v189 = vld [vmem:[%s1 + $0x570] sm:$0xff]
    %v190 = vld [vmem:[%s1 + $0x578] sm:$0xff]
    %v191 = vld [vmem:[%s1 + $0x580] sm:$0xff]
    %v192 = vld [vmem:[%s1 + $0x588] sm:$0xff]
    %v193 = vld [vmem:[%s1 + $0x590] sm:$0xff]
    %v194 = vld [vmem:[%s1 + $0x598] sm:$0xff]
    %v195 = vld [vmem:[%s1 + $0x5a0] sm:$0xff]
    %v196 = vld [vmem:[%s1 + $0x5a8] sm:$0xff]
    %v197 = vld [vmem:[%s1 + $0x5b0] sm:$0xff]
    %v198 = vld [vmem:[%s1 + $0x5b8] sm:$0xff]
    %v199 = vld [vmem:[%s1 + $0x5c0] sm:$0xff]
    %v200 = vld [vmem:[%s1 + $0x5c8] sm:$0xff]
    %v201 = vld [vmem:[%s1 + $0x5d0] sm:$0xff]
    %v202 = vld [vmem:[%s1 + $0x5d8] sm:$0xff]
    %v203 = vld [vmem:[%s1 + $0x5e0] sm:$0xff]
    %v204 = vld [vmem:[%s1 + $0x5e8] sm:$0xff]
    %v205 = vld [vmem:[%s1 + $0x5f0] sm:$0xff]
    %v206 = vld [vmem:[%s1 + $0x5f8] sm:$0xff]
    %v207 = vld [vmem:[%s1 + $0x600] sm:$0xff]
    %v208 = vld [vmem:[%s1 + $0x608] sm:$0xff]
    %v209 = vld [vmem:[%s1 + $0x610] sm:$0xff]
    %v210 = vld [vmem:[%s1 + $0x618] sm:$0xff]
    %v211 = vld [vmem:[%s1 + $0x620] sm:$0xff]
    %v212 = vld [vmem:[%s1 + $0x628] sm:$0xff]
    %v213 = vld [vmem:[%s1 + $0x630] sm:$0xff]
    %v214 = vld [vmem:[%s1 + $0x638] sm:$0xff]
    %v215 = vld [vmem:[%s1 + $0x640] sm:$0xff]
    %v216 = vld [vmem:[%s1 + $0x648] sm:$0xff]
    %v217 = vld [vmem:[%s1 + $0x650] sm:$0xff]
    %v218 = vld [vmem:[%s1 + $0x658] sm:$0xff]
    %v219 = vld [vmem:[%s1 + $0x660] sm:$0xff]
    %v220 = vld [vmem:[%s1 + $0x668] sm:$0xff]
    %v221 = vld [vmem:[%s1 + $0x670] sm:$0xff]
    %v222 = vld [vmem:[%s1 + $0x678] sm:$0xff]
    %v223 = vld [vmem:[%s1 + $0x680] sm:$0xff]
    %v224 = vld [vmem:[%s1 + $0x688] sm:$0xff]
    %v225 = vld [vmem:[%s1 + $0x690] sm:$0xff]
    %v226 = vld [vmem:[%s1 + $0x698] sm:$0xff]
    %v227 = vld [vmem:[%s1 + $0x6a0] sm:$0xff]
    %v228 = vld [vmem:[%s1 + $0x6a8] sm:$0xff]
    %v229 = vld [vmem:[%s1 + $0x6b0] sm:$0xff]
    %v230 = vld [vmem:[%s1 + $0x6b8] sm:$0xff]
    %v231 = vld [vmem:[%s0] sm:$0xff]
    %v232 = vld [vmem:[%s0 + $0x8] sm:$0xff]
    %v233 = vld [vmem:[%s0 + $0x10] sm:$0xff]
    %v234 = vld [vmem:[%s0 + $0x18] sm:$0xff]
    %v235 = vld [vmem:[%s0 + $0x20] sm:$0xff]
    %v236 = vld [vmem:[%s0 + $0x28] sm:$0xff]
    %v237 = vld [vmem:[%s0 + $0x30] sm:$0xff]
    %v238 = vld [vmem:[%s0 + $0x38] sm:$0xff]
    %v239 = vld [vmem:[%s0 + $0x40] sm:$0xff]
    %v240 = vld [vmem:[%s0 + $0x48] sm:$0xff]
    %v241 = vld [vmem:[%s0 + $0x50] sm:$0xff]
    %v242 = vld [vmem:[%s0 + $0x58] sm:$0xff]
    %v243 = vld [vmem:[%s0 + $0x60] sm:$0xff]
    %v244 = vld [vmem:[%s0 + $0x68] sm:$0xff]
    %v245 = vld [vmem:[%s0 + $0x70] sm:$0xff]
    %v246 = vld [vmem:[%s0 + $0x78] sm:$0xff]
    %v247 = vld [vmem:[%s0 + $0x80] sm:$0xff]
    %v248 = vld [vmem:[%s0 + $0x88] sm:$0xff]
    %v249 = vld [vmem:[%s0 + $0x90] sm:$0xff]
    %v250 = vld [vmem:[%s0 + $0x98] sm:$0xff]
    %v251 = vld [vmem:[%s0 + $0xa0] sm:$0xff]
    %v252 = vld [vmem:[%s0 + $0xa8] sm:$0xff]
    %v253 = vld [vmem:[%s0 + $0xb0] sm:$0xff]
    %v254 = vld [vmem:[%s0 + $0xb8] sm:$0xff]
    %v255 = vld [vmem:[%s0 + $0xc0] sm:$0xff]
    %v256 = vld [vmem:[%s0 + $0xc8] sm:$0xff]
    %v257 = vld [vmem:[%s0 + $0xd0] sm:$0xff]
    %v258 = vld [vmem:[%s0 + $0xd8] sm:$0xff]
    %v259 = vld [vmem:[%s0 + $0xe0] sm:$0xff]
    %v260 = vld [vmem:[%s0 + $0xe8] sm:$0xff]
    %v261 = vld [vmem:[%s0 + $0xf0] sm:$0xff]
    %v262 = vld [vmem:[%s0 + $0xf8] sm:$0xff]
    %v263 = vld [vmem:[%s0 + $0x100] sm:$0xff]
    %v264 = vld [vmem:[%s0 + $0x108] sm:$0xff]
    %v265 = vld [vmem:[%s0 + $0x110] sm:$0xff]
    %v266 = vld [vmem:[%s0 + $0x118] sm:$0xff]
    %v267 = vld [vmem:[%s0 + $0x120] sm:$0xff]
    %v268 = vld [vmem:[%s0 + $0x128] sm:$0xff]
    %v269 = vld [vmem:[%s0 + $0x130] sm:$0xff]
    %v270 = vld [vmem:[%s0 + $0x138] sm:$0xff]
    %v271 = vld [vmem:[%s0 + $0x140] sm:$0xff]
    %v272 = vld [vmem:[%s0 + $0x148] sm:$0xff]
    %v273 = vld [vmem:[%s0 + $0x150] sm:$0xff]
    %v274 = vld [vmem:[%s0 + $0x158] sm:$0xff]
    %v275 = vld [vmem:[%s0 + $0x160] sm:$0xff]
    %v276 = vld [vmem:[%s0 + $0x168] sm:$0xff]
    %v277 = vld [vmem:[%s0 + $0x170] sm:$0xff]
    %v278 = vld [vmem:[%s0 + $0x178] sm:$0xff]
    %v279 = vld [vmem:[%s0 + $0x180] sm:$0xff]
    %v280 = vld [vmem:[%s0 + $0x188] sm:$0xff]
    %v281 = vld [vmem:[%s0 + $0x190] sm:$0xff]
    %v282 = vld [vmem:[%s0 + $0x198] sm:$0xff]
    %v283 = vld [vmem:[%s0 + $0x1a0] sm:$0xff]
    %v284 = vld [vmem:[%s0 + $0x1a8] sm:$0xff]
    %v285 = vld [vmem:[%s0 + $0x1b0] sm:$0xff]
    %v286 = vld [vmem:[%s0 + $0x1b8] sm:$0xff]
    %v287 = vld [vmem:[%s0 + $0x1c0] sm:$0xff]
    %v288 = vld [vmem:[%s0 + $0x1c8] sm:$0xff]
    %v289 = vld [vmem:[%s0 + $0x1d0] sm:$0xff]
    %v290 = vld [vmem:[%s0 + $0x1d8] sm:$0xff]
    %v291 = vld [vmem:[%s0 + $0x1e0] sm:$0xff]
    %v292 = vld [vmem:[%s0 + $0x1e8] sm:$0xff]
    %v293 = vld [vmem:[%s0 + $0x1f0] sm:$0xff]
    %v294 = vld [vmem:[%s0 + $0x1f8] sm:$0xff]
    %v295 = vld [vmem:[%s0 + $0x200] sm:$0xff]
    %v296 = vld [vmem:[%s0 + $0x208] sm:$0xff]
    %v297 = vld [vmem:[%s0 + $0x210] sm:$0xff]
    %v298 = vld [vmem:[%s0 + $0x218] sm:$0xff]
    %v299 = vld [vmem:[%s0 + $0x220] sm:$0xff]
    %v300 = vld [vmem:[%s0 + $0x228] sm:$0xff]
    %v301 = vld [vmem:[%s0 + $0x230] sm:$0xff]
    %v302 = vld [vmem:[%s0 + $0x238] sm:$0xff]
    %v303 = vld [vmem:[%s0 + $0x240] sm:$0xff]
    %v304 = vld [vmem:[%s0 + $0x248] sm:$0xff]
    %v305 = vld [vmem:[%s0 + $0x250] sm:$0xff]
    %v306 = vld [vmem:[%s0 + $0x258] sm:$0xff]
    %v307 = vld [vmem:[%s0 + $0x260] sm:$0xff]
    %v308 = vld [vmem:[%s0 + $0x268] sm:$0xff]
    %v309 = vld [vmem:[%s0 + $0x270] sm:$0xff]
    %v310 = vld [vmem:[%s0 + $0x278] sm:$0xff]
    %v311 = vld [vmem:[%s0 + $0x280] sm:$0xff]
    %v312 = vld [vmem:[%s0 + $0x288] sm:$0xff]
    %v313 = vld [vmem:[%s0 + $0x290] sm:$0xff]
    %v314 = vld [vmem:[%s0 + $0x298] sm:$0xff]
    %v315 = vld [vmem:[%s0 + $0x2a0] sm:$0xff]
    %v316 = vld [vmem:[%s0 + $0x2a8] sm:$0xff]
    %v317 = vld [vmem:[%s0 + $0x2b0] sm:$0xff]
    %v318 = vld [vmem:[%s0 + $0x2b8] sm:$0xff]
    %v319 = vld [vmem:[%s0 + $0x2c0] sm:$0xff]
    %v320 = vld [vmem:[%s0 + $0x2c8] sm:$0xff]
    %v321 = vld [vmem:[%s0 + $0x2d0] sm:$0xff]
    %v322 = vld [vmem:[%s0 + $0x2d8] sm:$0xff]
    %v323 = vld [vmem:[%s0 + $0x2e0] sm:$0xff]
    %v324 = vld [vmem:[%s0 + $0x2e8] sm:$0xff]
    %v325 = vld [vmem:[%s0 + $0x2f0] sm:$0xff]
    %v326 = vld [vmem:[%s0 + $0x2f8] sm:$0xff]
    %v327 = vld [vmem:[%s0 + $0x300] sm:$0xff]
    %v328 = vld [vmem:[%s0 + $0x308] sm:$0xff]
    %v329 = vld [vmem:[%s0 + $0x310] sm:$0xff]
    %v330 = vld [vmem:[%s0 + $0x318] sm:$0xff]
    %v331 = vld [vmem:[%s0 + $0x320] sm:$0xff]
    %v332 = vld [vmem:[%s0 + $0x328] sm:$0xff]
    %v333 = vld [vmem:[%s0 + $0x330] sm:$0xff]
    %v334 = vld [vmem:[%s0 + $0x338] sm:$0xff]
    %v335 = vld [vmem:[%s0 + $0x340] sm:$0xff]
    %v336 = vld [vmem:[%s0 + $0x348] sm:$0xff]
    %v337 = vld [vmem:[%s0 + $0x350] sm:$0xff]
    %v338 = vld [vmem:[%s0 + $0x358] sm:$0xff]
    %v339 = vld [vmem:[%s0 + $0x360] sm:$0xff]
    %v340 = vld [vmem:[%s0 + $0x368] sm:$0xff]
    %v341 = vld [vmem:[%s0 + $0x370] sm:$0xff]
    %v342 = vld [vmem:[%s0 + $0x378] sm:$0xff]
    %v343 = vld [vmem:[%s0 + $0x380] sm:$0xff]
    %v344 = vld [vmem:[%s0 + $0x388] sm:$0xff]
    %v345 = vld [vmem:[%s0 + $0x390] sm:$0xff]
    %v346 = vld [vmem:[%s0 + $0x398] sm:$0xff]
    %v347 = vld [vmem:[%s0 + $0x3a0] sm:$0xff]
    %v348 = vld [vmem:[%s0 + $0x3a8] sm:$0xff]
    %v349 = vld [vmem:[%s0 + $0x3b0] sm:$0xff]
    %v350 = vld [vmem:[%s0 + $0x3b8] sm:$0xff]
    %v351 = vld [vmem:[%s0 + $0x3c0] sm:$0xff]
    %v352 = vld [vmem:[%s0 + $0x3c8] sm:$0xff]
    %v353 = vld [vmem:[%s0 + $0x3d0] sm:$0xff]
    %v354 = vld [vmem:[%s0 + $0x3d8] sm:$0xff]
    %v355 = vld [vmem:[%s0 + $0x3e0] sm:$0xff]
    %v356 = vld [vmem:[%s0 + $0x3e8] sm:$0xff]
    %v357 = vld [vmem:[%s0 + $0x3f0] sm:$0xff]
    %v358 = vld [vmem:[%s0 + $0x3f8] sm:$0xff]
    %v359 = vld [vmem:[%s0 + $0x400] sm:$0xff]
    %v360 = vld [vmem:[%s0 + $0x408] sm:$0xff]
    %v361 = vld [vmem:[%s0 + $0x410] sm:$0xff]
    %v362 = vld [vmem:[%s0 + $0x418] sm:$0xff]
    %v363 = vld [vmem:[%s0 + $0x420] sm:$0xff]
    %v364 = vld [vmem:[%s0 + $0x428] sm:$0xff]
    %v365 = vld [vmem:[%s0 + $0x430] sm:$0xff]
    %v366 = vld [vmem:[%s0 + $0x438] sm:$0xff]
    %v367 = vld [vmem:[%s0 + $0x440] sm:$0xff]
    %v368 = vld [vmem:[%s0 + $0x448] sm:$0xff]
    %v369 = vld [vmem:[%s0 + $0x450] sm:$0xff]
    %v370 = vld [vmem:[%s0 + $0x458] sm:$0xff]
    %v371 = vld [vmem:[%s0 + $0x460] sm:$0xff]
    %v372 = vld [vmem:[%s0 + $0x468] sm:$0xff]
    %v373 = vld [vmem:[%s0 + $0x470] sm:$0xff]
    %v374 = vld [vmem:[%s0 + $0x478] sm:$0xff]
    %v375 = vld [vmem:[%s0 + $0x480] sm:$0xff]
    %v376 = vld [vmem:[%s0 + $0x488] sm:$0xff]
    %v377 = vld [vmem:[%s0 + $0x490] sm:$0xff]
    %v378 = vld [vmem:[%s0 + $0x498] sm:$0xff]
    %v379 = vld [vmem:[%s0 + $0x4a0] sm:$0xff]
    %v380 = vld [vmem:[%s0 + $0x4a8] sm:$0xff]
    %v381 = vld [vmem:[%s0 + $0x4b0] sm:$0xff]
    %v382 = vld [vmem:[%s0 + $0x4b8] sm:$0xff]
    %v383 = vld [vmem:[%s0 + $0x4c0] sm:$0xff]
    %v384 = vld [vmem:[%s0 + $0x4c8] sm:$0xff]
    %v385 = vld [vmem:[%s0 + $0x4d0] sm:$0xff]
    %v386 = vld [vmem:[%s0 + $0x4d8] sm:$0xff]
    %v387 = vld [vmem:[%s0 + $0x4e0] sm:$0xff]
    %v388 = vld [vmem:[%s0 + $0x4e8] sm:$0xff]
    %v389 = vld [vmem:[%s0 + $0x4f0] sm:$0xff]
    %v390 = vld [vmem:[%s0 + $0x4f8] sm:$0xff]
    %v391 = vld [vmem:[%s0 + $0x500] sm:$0xff]
    %v392 = vld [vmem:[%s0 + $0x508] sm:$0xff]
    %v393 = vld [vmem:[%s0 + $0x510] sm:$0xff]
    %v394 = vld [vmem:[%s0 + $0x518] sm:$0xff]
    %v395 = vld [vmem:[%s0 + $0x520] sm:$0xff]
    %v396 = vld [vmem:[%s0 + $0x528] sm:$0xff]
    %v397 = vld [vmem:[%s0 + $0x530] sm:$0xff]
    %v398 = vld [vmem:[%s0 + $0x538] sm:$0xff]
    %v399 = vld [vmem:[%s0 + $0x540] sm:$0xff]
    %v400 = vld [vmem:[%s0 + $0x548] sm:$0xff]
    %v401 = vld [vmem:[%s0 + $0x550] sm:$0xff]
    %v402 = vld [vmem:[%s0 + $0x558] sm:$0xff]
    %v403 = vld [vmem:[%s0 + $0x560] sm:$0xff]
    %v404 = vld [vmem:[%s0 + $0x568] sm:$0xff]
    %v405 = vld [vmem:[%s0 + $0x570] sm:$0xff]
    %v406 = vld [vmem:[%s0 + $0x578] sm:$0xff]
    %v407 = vld [vmem:[%s0 + $0x580] sm:$0xff]
    %v408 = vld [vmem:[%s0 + $0x588] sm:$0xff]
    %v409 = vld [vmem:[%s0 + $0x590] sm:$0xff]
    %v410 = vld [vmem:[%s0 + $0x598] sm:$0xff]
    %v411 = vld [vmem:[%s0 + $0x5a0] sm:$0xff]
    %v412 = vld [vmem:[%s0 + $0x5a8] sm:$0xff]
    %v413 = vld [vmem:[%s0 + $0x5b0] sm:$0xff]
    %v414 = vld [vmem:[%s0 + $0x5b8] sm:$0xff]
    %v415 = vld [vmem:[%s0 + $0x5c0] sm:$0xff]
    %v416 = vld [vmem:[%s0 + $0x5c8] sm:$0xff]
    %v417 = vld [vmem:[%s0 + $0x5d0] sm:$0xff]
    %v418 = vld [vmem:[%s0 + $0x5d8] sm:$0xff]
    %v419 = vld [vmem:[%s0 + $0x5e0] sm:$0xff]
    %v420 = vld [vmem:[%s0 + $0x5e8] sm:$0xff]
    %v421 = vld [vmem:[%s0 + $0x5f0] sm:$0xff]
    %v422 = vld [vmem:[%s0 + $0x5f8] sm:$0xff]
    %v423 = vld [vmem:[%s0 + $0x600] sm:$0xff]
    %v424 = vld [vmem:[%s0 + $0x608] sm:$0xff]
    %v425 = vld [vmem:[%s0 + $0x610] sm:$0xff]
    %v426 = vld [vmem:[%s0 + $0x618] sm:$0xff]
    %v427 = vld [vmem:[%s0 + $0x620] sm:$0xff]
    %v428 = vld [vmem:[%s0 + $0x628] sm:$0xff]
    %v429 = vld [vmem:[%s0 + $0x630] sm:$0xff]
    %v430 = vld [vmem:[%s0 + $0x638] sm:$0xff]
    %v431 = vld [vmem:[%s0 + $0x640] sm:$0xff]
    %v432 = vld [vmem:[%s0 + $0x648] sm:$0xff]
    %v433 = vld [vmem:[%s0 + $0x650] sm:$0xff]
    %v434 = vld [vmem:[%s0 + $0x658] sm:$0xff]
    %v435 = vld [vmem:[%s0 + $0x660] sm:$0xff]
    %v436 = vld [vmem:[%s0 + $0x668] sm:$0xff]
    %v437 = vld [vmem:[%s0 + $0x670] sm:$0xff]
    %v438 = vld [vmem:[%s0 + $0x678] sm:$0xff]
    %v439 = vld [vmem:[%s0 + $0x680] sm:$0xff]
    %v440 = vld [vmem:[%s0 + $0x688] sm:$0xff]
    %v441 = vld [vmem:[%s0 + $0x690] sm:$0xff]
    %v442 = vld [vmem:[%s0 + $0x698] sm:$0xff]
    %v443 = vld [vmem:[%s0 + $0x6a0] sm:$0xff]
    %v444 = vld [vmem:[%s0 + $0x6a8] sm:$0xff]
    %v445 = vld [vmem:[%s0 + $0x6b0] sm:$0xff]
    %v446 = vld [vmem:[%s0 + $0x6b8] sm:$0xff]
    %v447 = vld [vmem:[%s0 + $0x6c0] sm:$0xff]
    %v448 = vld [vmem:[%s0 + $0x6c8] sm:$0xff]
    %v449 = vld [vmem:[%s0 + $0x6d0] sm:$0xff]
    %v450 = vld [vmem:[%s0 + $0x6d8] sm:$0xff]
    %v451 = vld [vmem:[%s0 + $0x6e0] sm:$0xff]
    %v452 = vld [vmem:[%s0 + $0x6e8] sm:$0xff]
    %v453 = vld [vmem:[%s0 + $0x6f0] sm:$0xff]
    %v454 = vld [vmem:[%s0 + $0x6f8] sm:$0xff]
    %v455 = vld [vmem:[%s0 + $0x700] sm:$0xff]
    %v456 = vld [vmem:[%s0 + $0x708] sm:$0xff]
    %v457 = vld [vmem:[%s0 + $0x710] sm:$0xff]
    %v458 = vld [vmem:[%s0 + $0x718] sm:$0xff]
    %v459 = vld [vmem:[%s0 + $0x720] sm:$0xff]
    %v460 = vld [vmem:[%s0 + $0x728] sm:$0xff]
    %v461 = vld [vmem:[%s0 + $0x730] sm:$0xff]
    %v462 = vld [vmem:[%s0 + $0x738] sm:$0xff]
    %v463 = vld [vmem:[%s0 + $0x740] sm:$0xff]
    %v464 = vld [vmem:[%s0 + $0x748] sm:$0xff]
    %v465 = vld [vmem:[%s0 + $0x750] sm:$0xff]
    %v466 = vld [vmem:[%s0 + $0x758] sm:$0xff]
    %v467 = vld [vmem:[%s0 + $0x760] sm:$0xff]
    %v468 = vld [vmem:[%s0 + $0x768] sm:$0xff]
    %v469 = vld [vmem:[%s0 + $0x770] sm:$0xff]
    %v470 = vld [vmem:[%s0 + $0x778] sm:$0xff]
    %v471 = vld [vmem:[%s0 + $0x780] sm:$0xff]
    %v472 = vld [vmem:[%s0 + $0x788] sm:$0xff]
    %v473 = vld [vmem:[%s0 + $0x790] sm:$0xff]
    %v474 = vld [vmem:[%s0 + $0x798] sm:$0xff]
    %v475 = vld [vmem:[%s0 + $0x7a0] sm:$0xff]
    %v476 = vld [vmem:[%s0 + $0x7a8] sm:$0xff]
    %v477 = vld [vmem:[%s0 + $0x7b0] sm:$0xff]
    %v478 = vld [vmem:[%s0 + $0x7b8] sm:$0xff]
    %v479 = vld [vmem:[%s0 + $0x7c0] sm:$0xff]
    %v480 = vld [vmem:[%s0 + $0x7c8] sm:$0xff]
    %v481 = vld [vmem:[%s0 + $0x7d0] sm:$0xff]
    %v482 = vld [vmem:[%s0 + $0x7d8] sm:$0xff]
    %v483 = vld [vmem:[%s0 + $0x7e0] sm:$0xff]
    %v484 = vld [vmem:[%s0 + $0x7e8] sm:$0xff]
    %v485 = vld [vmem:[%s0 + $0x7f0] sm:$0xff]
    %v486 = vld [vmem:[%s0 + $0x7f8] sm:$0xff]
    %v487 = vld [vmem:[%s0 + $0x800] sm:$0xff]
    %v488 = vld [vmem:[%s0 + $0x808] sm:$0xff]
    %v489 = vld [vmem:[%s0 + $0x810] sm:$0xff]
    %v490 = vld [vmem:[%s0 + $0x818] sm:$0xff]
    %v491 = vld [vmem:[%s0 + $0x820] sm:$0xff]
    %v492 = vld [vmem:[%s0 + $0x828] sm:$0xff]
    %v493 = vld [vmem:[%s0 + $0x830] sm:$0xff]
    %v494 = vld [vmem:[%s0 + $0x838] sm:$0xff]
    %v495 = vld [vmem:[%s0 + $0x840] sm:$0xff]
    %v496 = vld [vmem:[%s0 + $0x848] sm:$0xff]
    %v497 = vld [vmem:[%s0 + $0x850] sm:$0xff]
    %v498 = vld [vmem:[%s0 + $0x858] sm:$0xff]
    %v499 = vld [vmem:[%s0 + $0x860] sm:$0xff]
    %v500 = vld [vmem:[%s0 + $0x868] sm:$0xff]
    %v501 = vld [vmem:[%s0 + $0x870] sm:$0xff]
    %v502 = vld [vmem:[%s0 + $0x878] sm:$0xff]
    %v503 = vld [vmem:[%s0 + $0x880] sm:$0xff]
    %v504 = vld [vmem:[%s0 + $0x888] sm:$0xff]
    %v505 = vld [vmem:[%s0 + $0x890] sm:$0xff]
    %v506 = vld [vmem:[%s0 + $0x898] sm:$0xff]
    %v507 = vld [vmem:[%s0 + $0x8a0] sm:$0xff]
    %v508 = vld [vmem:[%s0 + $0x8a8] sm:$0xff]
    %v509 = vld [vmem:[%s0 + $0x8b0] sm:$0xff]
    %v510 = vld [vmem:[%s0 + $0x8b8] sm:$0xff]
    %v511 = vld [vmem:[%s0 + $0x8c0] sm:$0xff]
    %v512 = vld [vmem:[%s0 + $0x8c8] sm:$0xff]
    %v513 = vld [vmem:[%s0 + $0x8d0] sm:$0xff]
    %v514 = vld [vmem:[%s0 + $0x8d8] sm:$0xff]
    %v515 = vld [vmem:[%s0 + $0x8e0] sm:$0xff]
    %v516 = vld [vmem:[%s0 + $0x8e8] sm:$0xff]
    %v517 = vld [vmem:[%s0 + $0x8f0] sm:$0xff]
    %v518 = vld [vmem:[%s0 + $0x8f8] sm:$0xff]
    %519 = vmatprep.subr.mxu0 0.0
    %520 = vmatpush1.msra.mxu0 %v246
    %521 = vmatprep.subr.mxu0 0.0
    %522 = vmatpush1.msra.mxu0 %v245
    %523 = vmatprep.subr.mxu0 0.0
    %524 = vmatpush1.msra.mxu0 %v244
    %525 = vmatprep.subr.mxu0 0.0
    %526 = vmatpush1.msra.mxu0 %v243
    %527 = vmatprep.subr.mxu0 0.0
    %528 = vmatpush1.msra.mxu0 %v242
    %529 = vmatprep.subr.mxu0 0.0
    %530 = vmatpush1.msra.mxu0 %v241
    %531 = vmatprep.subr.mxu0 0.0
    %532 = vmatpush1.msra.mxu0 %v240
    %533 = vmatprep.subr.mxu0 0.0
    %534 = vmatpush1.msra.mxu0 %v239
    %535 = vmatprep.subr.mxu0 0.0
    %536 = vmatpush1.msra.mxu0 %v238
    %537 = vmatprep.subr.mxu0 0.0
    %538 = vmatpush1.msra.mxu0 %v237
    %539 = vmatprep.subr.mxu0 0.0
    %540 = vmatpush1.msra.mxu0 %v236
    %541 = vmatprep.subr.mxu0 0.0
    %542 = vmatpush1.msra.mxu0 %v235
    %543 = vmatprep.subr.mxu0 0.0
    %544 = vmatpush1.msra.mxu0 %v234
    %545 = vmatprep.subr.mxu0 0.0
    %546 = vmatpush1.msra.mxu0 %v233
    %547 = vmatprep.subr.mxu0 0.0
    %548 = vmatpush1.msra.mxu0 %v232
    %549 = vmatprep.subr.mxu0 0.0
    %550 = vmatpush1.msra.mxu0 %v231
    %551 = vmatprep.subr.mxu0 0.0
    %552 = vmatpush2.msra.mxu0 %v262
    %553 = vmatprep.subr.mxu0 0.0
    %554 = vmatpush2.msra.mxu0 %v261
    %555 = vmatprep.subr.mxu0 0.0
    %556 = vmatpush2.msra.mxu0 %v260
    %557 = vmatprep.subr.mxu0 0.0
    %558 = vmatpush2.msra.mxu0 %v259
    %559 = vmatprep.subr.mxu0 0.0
    %560 = vmatpush2.msra.mxu0 %v258
    %561 = vmatprep.subr.mxu0 0.0
    %562 = vmatpush2.msra.mxu0 %v257
    %563 = vmatprep.subr.mxu0 0.0
    %564 = vmatpush2.msra.mxu0 %v256
    %565 = vmatprep.subr.mxu0 0.0
    %566 = vmatpush2.msra.mxu0 %v255
    %567 = vmatprep.subr.mxu0 0.0
    %568 = vmatpush2.msra.mxu0 %v254
    %569 = vmatprep.subr.mxu0 0.0
    %570 = vmatpush2.msra.mxu0 %v253
    %571 = vmatprep.subr.mxu0 0.0
    %572 = vmatpush2.msra.mxu0 %v252
    %573 = vmatprep.subr.mxu0 0.0
    %574 = vmatpush2.msra.mxu0 %v251
    %575 = vmatprep.subr.mxu0 0.0
    %576 = vmatpush2.msra.mxu0 %v250
    %577 = vmatprep.subr.mxu0 0.0
    %578 = vmatpush2.msra.mxu0 %v249
    %579 = vmatprep.subr.mxu0 0.0
    %580 = vmatpush2.msra.mxu0 %v248
    %581 = vmatprep.subr.mxu0 0.0
    %582 = vmatpush2.msra.mxu0 %v247
    %583 = vmatprep.mubr.f32.mxu0 %v16
    %584 = vmatmul.mubr.f32.gmra.mxu0 %v15
    %v585 = vpop.f32.mrf.mxu0
    %v586 = vadd.f32 0.0, %v585
    %v587 = vpop.f32.mrf.mxu0
    %588 = vmatprep.mubr.f32.mxu0 %v34
    %589 = vmatmul.mubr.f32.gmra.mxu0 %v33
    %v590 = vpop.f32.mrf.mxu0
    %v591 = vadd.f32 0.0, %v590
    %v592 = vpop.f32.mrf.mxu0
    %593 = vmatprep.mubr.f32.mxu0 %v52
    %594 = vmatmul.mubr.f32.gmra.mxu0 %v51
    %v595 = vpop.f32.mrf.mxu0
    %v596 = vadd.f32 0.0, %v595
    %v597 = vpop.f32.mrf.mxu0
    %598 = vmatprep.mubr.f32.mxu0 %v70
    %599 = vmatmul.mubr.f32.gmra.mxu0 %v69
    %v600 = vpop.f32.mrf.mxu0
    %v601 = vadd.f32 0.0, %v600
    %v602 = vpop.f32.mrf.mxu0
    %603 = vmatprep.mubr.f32.mxu0 %v88
    %604 = vmatmul.mubr.f32.gmra.mxu0 %v87
    %v605 = vpop.f32.mrf.mxu0
    %v606 = vadd.f32 0.0, %v605
    %v607 = vpop.f32.mrf.mxu0
    %608 = vmatprep.mubr.f32.mxu0 %v106
    %609 = vmatmul.mubr.f32.gmra.mxu0 %v105
    %v610 = vpop.f32.mrf.mxu0
    %v611 = vadd.f32 0.0, %v610
    %v612 = vpop.f32.mrf.mxu0
    %613 = vmatprep.mubr.f32.mxu0 %v124
    %614 = vmatmul.mubr.f32.gmra.mxu0 %v123
    %v615 = vpop.f32.mrf.mxu0
    %v616 = vadd.f32 0.0, %v615
    %v617 = vpop.f32.mrf.mxu0
    %618 = vmatprep.mubr.f32.mxu0 %v142
    %619 = vmatmul.mubr.f32.gmra.mxu0 %v141
    %v620 = vpop.f32.mrf.mxu0
    %v621 = vadd.f32 0.0, %v620
    %v622 = vpop.f32.mrf.mxu0
    %623 = vmatprep.mubr.f32.mxu0 %v160
    %624 = vmatmul.mubr.f32.gmra.mxu0 %v159
    %v625 = vpop.f32.mrf.mxu0
    %v626 = vadd.f32 0.0, %v625
    %v627 = vpop.f32.mrf.mxu0
    %628 = vmatprep.mubr.f32.mxu0 %v178
    %629 = vmatmul.mubr.f32.gmra.mxu0 %v177
    %v630 = vpop.f32.mrf.mxu0
    %v631 = vadd.f32 0.0, %v630
    %v632 = vpop.f32.mrf.mxu0
    %633 = vmatprep.mubr.f32.mxu0 %v196
    %634 = vmatmul.mubr.f32.gmra.mxu0 %v195
    %v635 = vpop.f32.mrf.mxu0
    %v636 = vadd.f32 0.0, %v635
    %v637 = vpop.f32.mrf.mxu0
    %638 = vmatprep.mubr.f32.mxu0 %v214
    %639 = vmatmul.mubr.f32.gmra.mxu0 %v213
    %v640 = vpop.f32.mrf.mxu0
    %v641 = vadd.f32 0.0, %v640
    %v642 = vpop.f32.mrf.mxu0
    %643 = vdwg.mxu0
    %644 = vmatprep.subr.mxu0 0.0
    %645 = vmatpush1.msra.mxu0 %v278
    %646 = vmatprep.subr.mxu0 0.0
    %647 = vmatpush1.msra.mxu0 %v277
    %648 = vmatprep.subr.mxu0 0.0
    %649 = vmatpush1.msra.mxu0 %v276
    %650 = vmatprep.subr.mxu0 0.0
    %651 = vmatpush1.msra.mxu0 %v275
    %652 = vmatprep.subr.mxu0 0.0
    %653 = vmatpush1.msra.mxu0 %v274
    %654 = vmatprep.subr.mxu0 0.0
    %655 = vmatpush1.msra.mxu0 %v273
    %656 = vmatprep.subr.mxu0 0.0
    %657 = vmatpush1.msra.mxu0 %v272
    %658 = vmatprep.subr.mxu0 0.0
    %659 = vmatpush1.msra.mxu0 %v271
    %660 = vmatprep.subr.mxu0 0.0
    %661 = vmatpush1.msra.mxu0 %v270
    %662 = vmatprep.subr.mxu0 0.0
    %663 = vmatpush1.msra.mxu0 %v269
    %664 = vmatprep.subr.mxu0 0.0
    %665 = vmatpush1.msra.mxu0 %v268
    %666 = vmatprep.subr.mxu0 0.0
    %667 = vmatpush1.msra.mxu0 %v267
    %668 = vmatprep.subr.mxu0 0.0
    %669 = vmatpush1.msra.mxu0 %v266
    %670 = vmatprep.subr.mxu0 0.0
    %671 = vmatpush1.msra.mxu0 %v265
    %672 = vmatprep.subr.mxu0 0.0
    %673 = vmatpush1.msra.mxu0 %v264
    %674 = vmatprep.subr.mxu0 0.0
    %675 = vmatpush1.msra.mxu0 %v263
    %676 = vmatprep.subr.mxu0 0.0
    %677 = vmatpush2.msra.mxu0 %v294
    %678 = vmatprep.subr.mxu0 0.0
    %679 = vmatpush2.msra.mxu0 %v293
    %680 = vmatprep.subr.mxu0 0.0
    %681 = vmatpush2.msra.mxu0 %v292
    %682 = vmatprep.subr.mxu0 0.0
    %683 = vmatpush2.msra.mxu0 %v291
    %684 = vmatprep.subr.mxu0 0.0
    %685 = vmatpush2.msra.mxu0 %v290
    %686 = vmatprep.subr.mxu0 0.0
    %687 = vmatpush2.msra.mxu0 %v289
    %688 = vmatprep.subr.mxu0 0.0
    %689 = vmatpush2.msra.mxu0 %v288
    %690 = vmatprep.subr.mxu0 0.0
    %691 = vmatpush2.msra.mxu0 %v287
    %692 = vmatprep.subr.mxu0 0.0
    %693 = vmatpush2.msra.mxu0 %v286
    %694 = vmatprep.subr.mxu0 0.0
    %695 = vmatpush2.msra.mxu0 %v285
    %696 = vmatprep.subr.mxu0 0.0
    %697 = vmatpush2.msra.mxu0 %v284
    %698 = vmatprep.subr.mxu0 0.0
    %699 = vmatpush2.msra.mxu0 %v283
    %700 = vmatprep.subr.mxu0 0.0
    %701 = vmatpush2.msra.mxu0 %v282
    %702 = vmatprep.subr.mxu0 0.0
    %703 = vmatpush2.msra.mxu0 %v281
    %704 = vmatprep.subr.mxu0 0.0
    %705 = vmatpush2.msra.mxu0 %v280
    %706 = vmatprep.subr.mxu0 0.0
    %707 = vmatpush2.msra.mxu0 %v279
    %708 = vmatprep.mubr.f32.mxu0 %v18
    %709 = vmatmul.mubr.f32.gmra.mxu0 %v17
    %v710 = vpop.f32.mrf.mxu0
    %v711 = vadd.f32 %v586, %v710
    %v712 = vpop.f32.mrf.mxu0
    %713 = vmatprep.mubr.f32.mxu0 %v36
    %714 = vmatmul.mubr.f32.gmra.mxu0 %v35
    %v715 = vpop.f32.mrf.mxu0
    %v716 = vadd.f32 %v591, %v715
    %v717 = vpop.f32.mrf.mxu0
    %718 = vmatprep.mubr.f32.mxu0 %v54
    %719 = vmatmul.mubr.f32.gmra.mxu0 %v53
    %v720 = vpop.f32.mrf.mxu0
    %v721 = vadd.f32 %v596, %v720
    %v722 = vpop.f32.mrf.mxu0
    %723 = vmatprep.mubr.f32.mxu0 %v72
    %724 = vmatmul.mubr.f32.gmra.mxu0 %v71
    %v725 = vpop.f32.mrf.mxu0
    %v726 = vadd.f32 %v601, %v725
    %v727 = vpop.f32.mrf.mxu0
    %728 = vmatprep.mubr.f32.mxu0 %v90
    %729 = vmatmul.mubr.f32.gmra.mxu0 %v89
    %v730 = vpop.f32.mrf.mxu0
    %v731 = vadd.f32 %v606, %v730
    %v732 = vpop.f32.mrf.mxu0
    %733 = vmatprep.mubr.f32.mxu0 %v108
    %734 = vmatmul.mubr.f32.gmra.mxu0 %v107
    %v735 = vpop.f32.mrf.mxu0
    %v736 = vadd.f32 %v611, %v735
    %v737 = vpop.f32.mrf.mxu0
    %738 = vmatprep.mubr.f32.mxu0 %v126
    %739 = vmatmul.mubr.f32.gmra.mxu0 %v125
    %v740 = vpop.f32.mrf.mxu0
    %v741 = vadd.f32 %v616, %v740
    %v742 = vpop.f32.mrf.mxu0
    %743 = vmatprep.mubr.f32.mxu0 %v144
    %744 = vmatmul.mubr.f32.gmra.mxu0 %v143
    %v745 = vpop.f32.mrf.mxu0
    %v746 = vadd.f32 %v621, %v745
    %v747 = vpop.f32.mrf.mxu0
    %748 = vmatprep.mubr.f32.mxu0 %v162
    %749 = vmatmul.mubr.f32.gmra.mxu0 %v161
    %v750 = vpop.f32.mrf.mxu0
    %v751 = vadd.f32 %v626, %v750
    %v752 = vpop.f32.mrf.mxu0
    %753 = vmatprep.mubr.f32.mxu0 %v180
    %754 = vmatmul.mubr.f32.gmra.mxu0 %v179
    %v755 = vpop.f32.mrf.mxu0
    %v756 = vadd.f32 %v631, %v755
    %v757 = vpop.f32.mrf.mxu0
    %758 = vmatprep.mubr.f32.mxu0 %v198
    %759 = vmatmul.mubr.f32.gmra.mxu0 %v197
    %v760 = vpop.f32.mrf.mxu0
    %v761 = vadd.f32 %v636, %v760
    %v762 = vpop.f32.mrf.mxu0
    %763 = vmatprep.mubr.f32.mxu0 %v216
    %764 = vmatmul.mubr.f32.gmra.mxu0 %v215
    %v765 = vpop.f32.mrf.mxu0
    %v766 = vadd.f32 %v641, %v765
    %v767 = vpop.f32.mrf.mxu0
    %768 = vdwg.mxu0
    %769 = vmatprep.subr.mxu0 0.0
    %770 = vmatpush1.msra.mxu0 %v310
    %771 = vmatprep.subr.mxu0 0.0
    %772 = vmatpush1.msra.mxu0 %v309
    %773 = vmatprep.subr.mxu0 0.0
    %774 = vmatpush1.msra.mxu0 %v308
    %775 = vmatprep.subr.mxu0 0.0
    %776 = vmatpush1.msra.mxu0 %v307
    %777 = vmatprep.subr.mxu0 0.0
    %778 = vmatpush1.msra.mxu0 %v306
    %779 = vmatprep.subr.mxu0 0.0
    %780 = vmatpush1.msra.mxu0 %v305
    %781 = vmatprep.subr.mxu0 0.0
    %782 = vmatpush1.msra.mxu0 %v304
    %783 = vmatprep.subr.mxu0 0.0
    %784 = vmatpush1.msra.mxu0 %v303
    %785 = vmatprep.subr.mxu0 0.0
    %786 = vmatpush1.msra.mxu0 %v302
    %787 = vmatprep.subr.mxu0 0.0
    %788 = vmatpush1.msra.mxu0 %v301
    %789 = vmatprep.subr.mxu0 0.0
    %790 = vmatpush1.msra.mxu0 %v300
    %791 = vmatprep.subr.mxu0 0.0
    %792 = vmatpush1.msra.mxu0 %v299
    %793 = vmatprep.subr.mxu0 0.0
    %794 = vmatpush1.msra.mxu0 %v298
    %795 = vmatprep.subr.mxu0 0.0
    %796 = vmatpush1.msra.mxu0 %v297
    %797 = vmatprep.subr.mxu0 0.0
    %798 = vmatpush1.msra.mxu0 %v296
    %799 = vmatprep.subr.mxu0 0.0
    %800 = vmatpush1.msra.mxu0 %v295
    %801 = vmatprep.subr.mxu0 0.0
    %802 = vmatpush2.msra.mxu0 %v326
    %803 = vmatprep.subr.mxu0 0.0
    %804 = vmatpush2.msra.mxu0 %v325
    %805 = vmatprep.subr.mxu0 0.0
    %806 = vmatpush2.msra.mxu0 %v324
    %807 = vmatprep.subr.mxu0 0.0
    %808 = vmatpush2.msra.mxu0 %v323
    %809 = vmatprep.subr.mxu0 0.0
    %810 = vmatpush2.msra.mxu0 %v322
    %811 = vmatprep.subr.mxu0 0.0
    %812 = vmatpush2.msra.mxu0 %v321
    %813 = vmatprep.subr.mxu0 0.0
    %814 = vmatpush2.msra.mxu0 %v320
    %815 = vmatprep.subr.mxu0 0.0
    %816 = vmatpush2.msra.mxu0 %v319
    %817 = vmatprep.subr.mxu0 0.0
    %818 = vmatpush2.msra.mxu0 %v318
    %819 = vmatprep.subr.mxu0 0.0
    %820 = vmatpush2.msra.mxu0 %v317
    %821 = vmatprep.subr.mxu0 0.0
    %822 = vmatpush2.msra.mxu0 %v316
    %823 = vmatprep.subr.mxu0 0.0
    %824 = vmatpush2.msra.mxu0 %v315
    %825 = vmatprep.subr.mxu0 0.0
    %826 = vmatpush2.msra.mxu0 %v314
    %827 = vmatprep.subr.mxu0 0.0
    %828 = vmatpush2.msra.mxu0 %v313
    %829 = vmatprep.subr.mxu0 0.0
    %830 = vmatpush2.msra.mxu0 %v312
    %831 = vmatprep.subr.mxu0 0.0
    %832 = vmatpush2.msra.mxu0 %v311
    %833 = vmatprep.mubr.f32.mxu0 %v20
    %834 = vmatmul.mubr.f32.gmra.mxu0 %v19
    %v835 = vpop.f32.mrf.mxu0
    %v836 = vadd.f32 %v711, %v835
    %v837 = vpop.f32.mrf.mxu0
    %838 = vmatprep.mubr.f32.mxu0 %v38
    %839 = vmatmul.mubr.f32.gmra.mxu0 %v37
    %v840 = vpop.f32.mrf.mxu0
    %v841 = vadd.f32 %v716, %v840
    %v842 = vpop.f32.mrf.mxu0
    %843 = vmatprep.mubr.f32.mxu0 %v56
    %844 = vmatmul.mubr.f32.gmra.mxu0 %v55
    %v845 = vpop.f32.mrf.mxu0
    %v846 = vadd.f32 %v721, %v845
    %v847 = vpop.f32.mrf.mxu0
    %848 = vmatprep.mubr.f32.mxu0 %v74
    %849 = vmatmul.mubr.f32.gmra.mxu0 %v73
    %v850 = vpop.f32.mrf.mxu0
    %v851 = vadd.f32 %v726, %v850
    %v852 = vpop.f32.mrf.mxu0
    %853 = vmatprep.mubr.f32.mxu0 %v92
    %854 = vmatmul.mubr.f32.gmra.mxu0 %v91
    %v855 = vpop.f32.mrf.mxu0
    %v856 = vadd.f32 %v731, %v855
    %v857 = vpop.f32.mrf.mxu0
    %858 = vmatprep.mubr.f32.mxu0 %v110
    %859 = vmatmul.mubr.f32.gmra.mxu0 %v109
    %v860 = vpop.f32.mrf.mxu0
    %v861 = vadd.f32 %v736, %v860
    %v862 = vpop.f32.mrf.mxu0
    %863 = vmatprep.mubr.f32.mxu0 %v128
    %864 = vmatmul.mubr.f32.gmra.mxu0 %v127
    %v865 = vpop.f32.mrf.mxu0
    %v866 = vadd.f32 %v741, %v865
    %v867 = vpop.f32.mrf.mxu0
    %868 = vmatprep.mubr.f32.mxu0 %v146
    %869 = vmatmul.mubr.f32.gmra.mxu0 %v145
    %v870 = vpop.f32.mrf.mxu0
    %v871 = vadd.f32 %v746, %v870
    %v872 = vpop.f32.mrf.mxu0
    %873 = vmatprep.mubr.f32.mxu0 %v164
    %874 = vmatmul.mubr.f32.gmra.mxu0 %v163
    %v875 = vpop.f32.mrf.mxu0
    %v876 = vadd.f32 %v751, %v875
    %v877 = vpop.f32.mrf.mxu0
    %878 = vmatprep.mubr.f32.mxu0 %v182
    %879 = vmatmul.mubr.f32.gmra.mxu0 %v181
    %v880 = vpop.f32.mrf.mxu0
    %v881 = vadd.f32 %v756, %v880
    %v882 = vpop.f32.mrf.mxu0
    %883 = vmatprep.mubr.f32.mxu0 %v200
    %884 = vmatmul.mubr.f32.gmra.mxu0 %v199
    %v885 = vpop.f32.mrf.mxu0
    %v886 = vadd.f32 %v761, %v885
    %v887 = vpop.f32.mrf.mxu0
    %888 = vmatprep.mubr.f32.mxu0 %v218
    %889 = vmatmul.mubr.f32.gmra.mxu0 %v217
    %v890 = vpop.f32.mrf.mxu0
    %v891 = vadd.f32 %v766, %v890
    %v892 = vpop.f32.mrf.mxu0
    %893 = vdwg.mxu0
    %894 = vmatprep.subr.mxu0 0.0
    %895 = vmatpush1.msra.mxu0 %v342
    %896 = vmatprep.subr.mxu0 0.0
    %897 = vmatpush1.msra.mxu0 %v341
    %898 = vmatprep.subr.mxu0 0.0
    %899 = vmatpush1.msra.mxu0 %v340
    %900 = vmatprep.subr.mxu0 0.0
    %901 = vmatpush1.msra.mxu0 %v339
    %902 = vmatprep.subr.mxu0 0.0
    %903 = vmatpush1.msra.mxu0 %v338
    %904 = vmatprep.subr.mxu0 0.0
    %905 = vmatpush1.msra.mxu0 %v337
    %906 = vmatprep.subr.mxu0 0.0
    %907 = vmatpush1.msra.mxu0 %v336
    %908 = vmatprep.subr.mxu0 0.0
    %909 = vmatpush1.msra.mxu0 %v335
    %910 = vmatprep.subr.mxu0 0.0
    %911 = vmatpush1.msra.mxu0 %v334
    %912 = vmatprep.subr.mxu0 0.0
    %913 = vmatpush1.msra.mxu0 %v333
    %914 = vmatprep.subr.mxu0 0.0
    %915 = vmatpush1.msra.mxu0 %v332
    %916 = vmatprep.subr.mxu0 0.0
    %917 = vmatpush1.msra.mxu0 %v331
    %918 = vmatprep.subr.mxu0 0.0
    %919 = vmatpush1.msra.mxu0 %v330
    %920 = vmatprep.subr.mxu0 0.0
    %921 = vmatpush1.msra.mxu0 %v329
    %922 = vmatprep.subr.mxu0 0.0
    %923 = vmatpush1.msra.mxu0 %v328
    %924 = vmatprep.subr.mxu0 0.0
    %925 = vmatpush1.msra.mxu0 %v327
    %926 = vmatprep.subr.mxu0 0.0
    %927 = vmatpush2.msra.mxu0 %v358
    %928 = vmatprep.subr.mxu0 0.0
    %929 = vmatpush2.msra.mxu0 %v357
    %930 = vmatprep.subr.mxu0 0.0
    %931 = vmatpush2.msra.mxu0 %v356
    %932 = vmatprep.subr.mxu0 0.0
    %933 = vmatpush2.msra.mxu0 %v355
    %934 = vmatprep.subr.mxu0 0.0
    %935 = vmatpush2.msra.mxu0 %v354
    %936 = vmatprep.subr.mxu0 0.0
    %937 = vmatpush2.msra.mxu0 %v353
    %938 = vmatprep.subr.mxu0 0.0
    %939 = vmatpush2.msra.mxu0 %v352
    %940 = vmatprep.subr.mxu0 0.0
    %941 = vmatpush2.msra.mxu0 %v351
    %942 = vmatprep.subr.mxu0 0.0
    %943 = vmatpush2.msra.mxu0 %v350
    %944 = vmatprep.subr.mxu0 0.0
    %945 = vmatpush2.msra.mxu0 %v349
    %946 = vmatprep.subr.mxu0 0.0
    %947 = vmatpush2.msra.mxu0 %v348
    %948 = vmatprep.subr.mxu0 0.0
    %949 = vmatpush2.msra.mxu0 %v347
    %950 = vmatprep.subr.mxu0 0.0
    %951 = vmatpush2.msra.mxu0 %v346
    %952 = vmatprep.subr.mxu0 0.0
    %953 = vmatpush2.msra.mxu0 %v345
    %954 = vmatprep.subr.mxu0 0.0
    %955 = vmatpush2.msra.mxu0 %v344
    %956 = vmatprep.subr.mxu0 0.0
    %957 = vmatpush2.msra.mxu0 %v343
    %958 = vmatprep.mubr.f32.mxu0 %v22
    %959 = vmatmul.mubr.f32.gmra.mxu0 %v21
    %v960 = vpop.f32.mrf.mxu0
    %v961 = vadd.f32 %v836, %v960
    %v962 = vpop.f32.mrf.mxu0
    %963 = vmatprep.mubr.f32.mxu0 %v40
    %964 = vmatmul.mubr.f32.gmra.mxu0 %v39
    %v965 = vpop.f32.mrf.mxu0
    %v966 = vadd.f32 %v841, %v965
    %v967 = vpop.f32.mrf.mxu0
    %968 = vmatprep.mubr.f32.mxu0 %v58
    %969 = vmatmul.mubr.f32.gmra.mxu0 %v57
    %v970 = vpop.f32.mrf.mxu0
    %v971 = vadd.f32 %v846, %v970
    %v972 = vpop.f32.mrf.mxu0
    %973 = vmatprep.mubr.f32.mxu0 %v76
    %974 = vmatmul.mubr.f32.gmra.mxu0 %v75
    %v975 = vpop.f32.mrf.mxu0
    %v976 = vadd.f32 %v851, %v975
    %v977 = vpop.f32.mrf.mxu0
    %978 = vmatprep.mubr.f32.mxu0 %v94
    %979 = vmatmul.mubr.f32.gmra.mxu0 %v93
    %v980 = vpop.f32.mrf.mxu0
    %v981 = vadd.f32 %v856, %v980
    %v982 = vpop.f32.mrf.mxu0
    %983 = vmatprep.mubr.f32.mxu0 %v112
    %984 = vmatmul.mubr.f32.gmra.mxu0 %v111
    %v985 = vpop.f32.mrf.mxu0
    %v986 = vadd.f32 %v861, %v985
    %v987 = vpop.f32.mrf.mxu0
    %988 = vmatprep.mubr.f32.mxu0 %v130
    %989 = vmatmul.mubr.f32.gmra.mxu0 %v129
    %v990 = vpop.f32.mrf.mxu0
    %v991 = vadd.f32 %v866, %v990
    %v992 = vpop.f32.mrf.mxu0
    %993 = vmatprep.mubr.f32.mxu0 %v148
    %994 = vmatmul.mubr.f32.gmra.mxu0 %v147
    %v995 = vpop.f32.mrf.mxu0
    %v996 = vadd.f32 %v871, %v995
    %v997 = vpop.f32.mrf.mxu0
    %998 = vmatprep.mubr.f32.mxu0 %v166
    %999 = vmatmul.mubr.f32.gmra.mxu0 %v165
    %v1000 = vpop.f32.mrf.mxu0
    %v1001 = vadd.f32 %v876, %v1000
    %v1002 = vpop.f32.mrf.mxu0
    %1003 = vmatprep.mubr.f32.mxu0 %v184
    %1004 = vmatmul.mubr.f32.gmra.mxu0 %v183
    %v1005 = vpop.f32.mrf.mxu0
    %v1006 = vadd.f32 %v881, %v1005
    %v1007 = vpop.f32.mrf.mxu0
    %1008 = vmatprep.mubr.f32.mxu0 %v202
    %1009 = vmatmul.mubr.f32.gmra.mxu0 %v201
    %v1010 = vpop.f32.mrf.mxu0
    %v1011 = vadd.f32 %v886, %v1010
    %v1012 = vpop.f32.mrf.mxu0
    %1013 = vmatprep.mubr.f32.mxu0 %v220
    %1014 = vmatmul.mubr.f32.gmra.mxu0 %v219
    %v1015 = vpop.f32.mrf.mxu0
    %v1016 = vadd.f32 %v891, %v1015
    %v1017 = vpop.f32.mrf.mxu0
    %1018 = vdwg.mxu0
    %1019 = vmatprep.subr.mxu0 0.0
    %1020 = vmatpush1.msra.mxu0 %v374
    %1021 = vmatprep.subr.mxu0 0.0
    %1022 = vmatpush1.msra.mxu0 %v373
    %1023 = vmatprep.subr.mxu0 0.0
    %1024 = vmatpush1.msra.mxu0 %v372
    %1025 = vmatprep.subr.mxu0 0.0
    %1026 = vmatpush1.msra.mxu0 %v371
    %1027 = vmatprep.subr.mxu0 0.0
    %1028 = vmatpush1.msra.mxu0 %v370
    %1029 = vmatprep.subr.mxu0 0.0
    %1030 = vmatpush1.msra.mxu0 %v369
    %1031 = vmatprep.subr.mxu0 0.0
    %1032 = vmatpush1.msra.mxu0 %v368
    %1033 = vmatprep.subr.mxu0 0.0
    %1034 = vmatpush1.msra.mxu0 %v367
    %1035 = vmatprep.subr.mxu0 0.0
    %1036 = vmatpush1.msra.mxu0 %v366
    %1037 = vmatprep.subr.mxu0 0.0
    %1038 = vmatpush1.msra.mxu0 %v365
    %1039 = vmatprep.subr.mxu0 0.0
    %1040 = vmatpush1.msra.mxu0 %v364
    %1041 = vmatprep.subr.mxu0 0.0
    %1042 = vmatpush1.msra.mxu0 %v363
    %1043 = vmatprep.subr.mxu0 0.0
    %1044 = vmatpush1.msra.mxu0 %v362
    %1045 = vmatprep.subr.mxu0 0.0
    %1046 = vmatpush1.msra.mxu0 %v361
    %1047 = vmatprep.subr.mxu0 0.0
    %1048 = vmatpush1.msra.mxu0 %v360
    %1049 = vmatprep.subr.mxu0 0.0
    %1050 = vmatpush1.msra.mxu0 %v359
    %1051 = vmatprep.subr.mxu0 0.0
    %1052 = vmatpush2.msra.mxu0 %v390
    %1053 = vmatprep.subr.mxu0 0.0
    %1054 = vmatpush2.msra.mxu0 %v389
    %1055 = vmatprep.subr.mxu0 0.0
    %1056 = vmatpush2.msra.mxu0 %v388
    %1057 = vmatprep.subr.mxu0 0.0
    %1058 = vmatpush2.msra.mxu0 %v387
    %1059 = vmatprep.subr.mxu0 0.0
    %1060 = vmatpush2.msra.mxu0 %v386
    %1061 = vmatprep.subr.mxu0 0.0
    %1062 = vmatpush2.msra.mxu0 %v385
    %1063 = vmatprep.subr.mxu0 0.0
    %1064 = vmatpush2.msra.mxu0 %v384
    %1065 = vmatprep.subr.mxu0 0.0
    %1066 = vmatpush2.msra.mxu0 %v383
    %1067 = vmatprep.subr.mxu0 0.0
    %1068 = vmatpush2.msra.mxu0 %v382
    %1069 = vmatprep.subr.mxu0 0.0
    %1070 = vmatpush2.msra.mxu0 %v381
    %1071 = vmatprep.subr.mxu0 0.0
    %1072 = vmatpush2.msra.mxu0 %v380
    %1073 = vmatprep.subr.mxu0 0.0
    %1074 = vmatpush2.msra.mxu0 %v379
    %1075 = vmatprep.subr.mxu0 0.0
    %1076 = vmatpush2.msra.mxu0 %v378
    %1077 = vmatprep.subr.mxu0 0.0
    %1078 = vmatpush2.msra.mxu0 %v377
    %1079 = vmatprep.subr.mxu0 0.0
    %1080 = vmatpush2.msra.mxu0 %v376
    %1081 = vmatprep.subr.mxu0 0.0
    %1082 = vmatpush2.msra.mxu0 %v375
    %1083 = vmatprep.mubr.f32.mxu0 %v24
    %1084 = vmatmul.mubr.f32.gmra.mxu0 %v23
    %v1085 = vpop.f32.mrf.mxu0
    %v1086 = vadd.f32 %v961, %v1085
    %v1087 = vpop.f32.mrf.mxu0
    %1088 = vmatprep.mubr.f32.mxu0 %v42
    %1089 = vmatmul.mubr.f32.gmra.mxu0 %v41
    %v1090 = vpop.f32.mrf.mxu0
    %v1091 = vadd.f32 %v966, %v1090
    %v1092 = vpop.f32.mrf.mxu0
    %1093 = vmatprep.mubr.f32.mxu0 %v60
    %1094 = vmatmul.mubr.f32.gmra.mxu0 %v59
    %v1095 = vpop.f32.mrf.mxu0
    %v1096 = vadd.f32 %v971, %v1095
    %v1097 = vpop.f32.mrf.mxu0
    %1098 = vmatprep.mubr.f32.mxu0 %v78
    %1099 = vmatmul.mubr.f32.gmra.mxu0 %v77
    %v1100 = vpop.f32.mrf.mxu0
    %v1101 = vadd.f32 %v976, %v1100
    %v1102 = vpop.f32.mrf.mxu0
    %1103 = vmatprep.mubr.f32.mxu0 %v96
    %1104 = vmatmul.mubr.f32.gmra.mxu0 %v95
    %v1105 = vpop.f32.mrf.mxu0
    %v1106 = vadd.f32 %v981, %v1105
    %v1107 = vpop.f32.mrf.mxu0
    %1108 = vmatprep.mubr.f32.mxu0 %v114
    %1109 = vmatmul.mubr.f32.gmra.mxu0 %v113
    %v1110 = vpop.f32.mrf.mxu0
    %v1111 = vadd.f32 %v986, %v1110
    %v1112 = vpop.f32.mrf.mxu0
    %1113 = vmatprep.mubr.f32.mxu0 %v132
    %1114 = vmatmul.mubr.f32.gmra.mxu0 %v131
    %v1115 = vpop.f32.mrf.mxu0
    %v1116 = vadd.f32 %v991, %v1115
    %v1117 = vpop.f32.mrf.mxu0
    %1118 = vmatprep.mubr.f32.mxu0 %v150
    %1119 = vmatmul.mubr.f32.gmra.mxu0 %v149
    %v1120 = vpop.f32.mrf.mxu0
    %v1121 = vadd.f32 %v996, %v1120
    %v1122 = vpop.f32.mrf.mxu0
    %1123 = vmatprep.mubr.f32.mxu0 %v168
    %1124 = vmatmul.mubr.f32.gmra.mxu0 %v167
    %v1125 = vpop.f32.mrf.mxu0
    %v1126 = vadd.f32 %v1001, %v1125
    %v1127 = vpop.f32.mrf.mxu0
    %1128 = vmatprep.mubr.f32.mxu0 %v186
    %1129 = vmatmul.mubr.f32.gmra.mxu0 %v185
    %v1130 = vpop.f32.mrf.mxu0
    %v1131 = vadd.f32 %v1006, %v1130
    %v1132 = vpop.f32.mrf.mxu0
    %1133 = vmatprep.mubr.f32.mxu0 %v204
    %1134 = vmatmul.mubr.f32.gmra.mxu0 %v203
    %v1135 = vpop.f32.mrf.mxu0
    %v1136 = vadd.f32 %v1011, %v1135
    %v1137 = vpop.f32.mrf.mxu0
    %1138 = vmatprep.mubr.f32.mxu0 %v222
    %1139 = vmatmul.mubr.f32.gmra.mxu0 %v221
    %v1140 = vpop.f32.mrf.mxu0
    %v1141 = vadd.f32 %v1016, %v1140
    %v1142 = vpop.f32.mrf.mxu0
    %1143 = vdwg.mxu0
    %1144 = vmatprep.subr.mxu0 0.0
    %1145 = vmatpush1.msra.mxu0 %v406
    %1146 = vmatprep.subr.mxu0 0.0
    %1147 = vmatpush1.msra.mxu0 %v405
    %1148 = vmatprep.subr.mxu0 0.0
    %1149 = vmatpush1.msra.mxu0 %v404
    %1150 = vmatprep.subr.mxu0 0.0
    %1151 = vmatpush1.msra.mxu0 %v403
    %1152 = vmatprep.subr.mxu0 0.0
    %1153 = vmatpush1.msra.mxu0 %v402
    %1154 = vmatprep.subr.mxu0 0.0
    %1155 = vmatpush1.msra.mxu0 %v401
    %1156 = vmatprep.subr.mxu0 0.0
    %1157 = vmatpush1.msra.mxu0 %v400
    %1158 = vmatprep.subr.mxu0 0.0
    %1159 = vmatpush1.msra.mxu0 %v399
    %1160 = vmatprep.subr.mxu0 0.0
    %1161 = vmatpush1.msra.mxu0 %v398
    %1162 = vmatprep.subr.mxu0 0.0
    %1163 = vmatpush1.msra.mxu0 %v397
    %1164 = vmatprep.subr.mxu0 0.0
    %1165 = vmatpush1.msra.mxu0 %v396
    %1166 = vmatprep.subr.mxu0 0.0
    %1167 = vmatpush1.msra.mxu0 %v395
    %1168 = vmatprep.subr.mxu0 0.0
    %1169 = vmatpush1.msra.mxu0 %v394
    %1170 = vmatprep.subr.mxu0 0.0
    %1171 = vmatpush1.msra.mxu0 %v393
    %1172 = vmatprep.subr.mxu0 0.0
    %1173 = vmatpush1.msra.mxu0 %v392
    %1174 = vmatprep.subr.mxu0 0.0
    %1175 = vmatpush1.msra.mxu0 %v391
    %1176 = vmatprep.subr.mxu0 0.0
    %1177 = vmatpush2.msra.mxu0 %v422
    %1178 = vmatprep.subr.mxu0 0.0
    %1179 = vmatpush2.msra.mxu0 %v421
    %1180 = vmatprep.subr.mxu0 0.0
    %1181 = vmatpush2.msra.mxu0 %v420
    %1182 = vmatprep.subr.mxu0 0.0
    %1183 = vmatpush2.msra.mxu0 %v419
    %1184 = vmatprep.subr.mxu0 0.0
    %1185 = vmatpush2.msra.mxu0 %v418
    %1186 = vmatprep.subr.mxu0 0.0
    %1187 = vmatpush2.msra.mxu0 %v417
    %1188 = vmatprep.subr.mxu0 0.0
    %1189 = vmatpush2.msra.mxu0 %v416
    %1190 = vmatprep.subr.mxu0 0.0
    %1191 = vmatpush2.msra.mxu0 %v415
    %1192 = vmatprep.subr.mxu0 0.0
    %1193 = vmatpush2.msra.mxu0 %v414
    %1194 = vmatprep.subr.mxu0 0.0
    %1195 = vmatpush2.msra.mxu0 %v413
    %1196 = vmatprep.subr.mxu0 0.0
    %1197 = vmatpush2.msra.mxu0 %v412
    %1198 = vmatprep.subr.mxu0 0.0
    %1199 = vmatpush2.msra.mxu0 %v411
    %1200 = vmatprep.subr.mxu0 0.0
    %1201 = vmatpush2.msra.mxu0 %v410
    %1202 = vmatprep.subr.mxu0 0.0
    %1203 = vmatpush2.msra.mxu0 %v409
    %1204 = vmatprep.subr.mxu0 0.0
    %1205 = vmatpush2.msra.mxu0 %v408
    %1206 = vmatprep.subr.mxu0 0.0
    %1207 = vmatpush2.msra.mxu0 %v407
    %1208 = vmatprep.mubr.f32.mxu0 %v26
    %1209 = vmatmul.mubr.f32.gmra.mxu0 %v25
    %v1210 = vpop.f32.mrf.mxu0
    %v1211 = vadd.f32 %v1086, %v1210
    %v1212 = vpop.f32.mrf.mxu0
    %1213 = vmatprep.mubr.f32.mxu0 %v44
    %1214 = vmatmul.mubr.f32.gmra.mxu0 %v43
    %v1215 = vpop.f32.mrf.mxu0
    %v1216 = vadd.f32 %v1091, %v1215
    %v1217 = vpop.f32.mrf.mxu0
    %1218 = vmatprep.mubr.f32.mxu0 %v62
    %1219 = vmatmul.mubr.f32.gmra.mxu0 %v61
    %v1220 = vpop.f32.mrf.mxu0
    %v1221 = vadd.f32 %v1096, %v1220
    %v1222 = vpop.f32.mrf.mxu0
    %1223 = vmatprep.mubr.f32.mxu0 %v80
    %1224 = vmatmul.mubr.f32.gmra.mxu0 %v79
    %v1225 = vpop.f32.mrf.mxu0
    %v1226 = vadd.f32 %v1101, %v1225
    %v1227 = vpop.f32.mrf.mxu0
    %1228 = vmatprep.mubr.f32.mxu0 %v98
    %1229 = vmatmul.mubr.f32.gmra.mxu0 %v97
    %v1230 = vpop.f32.mrf.mxu0
    %v1231 = vadd.f32 %v1106, %v1230
    %v1232 = vpop.f32.mrf.mxu0
    %1233 = vmatprep.mubr.f32.mxu0 %v116
    %1234 = vmatmul.mubr.f32.gmra.mxu0 %v115
    %v1235 = vpop.f32.mrf.mxu0
    %v1236 = vadd.f32 %v1111, %v1235
    %v1237 = vpop.f32.mrf.mxu0
    %1238 = vmatprep.mubr.f32.mxu0 %v134
    %1239 = vmatmul.mubr.f32.gmra.mxu0 %v133
    %v1240 = vpop.f32.mrf.mxu0
    %v1241 = vadd.f32 %v1116, %v1240
    %v1242 = vpop.f32.mrf.mxu0
    %1243 = vmatprep.mubr.f32.mxu0 %v152
    %1244 = vmatmul.mubr.f32.gmra.mxu0 %v151
    %v1245 = vpop.f32.mrf.mxu0
    %v1246 = vadd.f32 %v1121, %v1245
    %v1247 = vpop.f32.mrf.mxu0
    %1248 = vmatprep.mubr.f32.mxu0 %v170
    %1249 = vmatmul.mubr.f32.gmra.mxu0 %v169
    %v1250 = vpop.f32.mrf.mxu0
    %v1251 = vadd.f32 %v1126, %v1250
    %v1252 = vpop.f32.mrf.mxu0
    %1253 = vmatprep.mubr.f32.mxu0 %v188
    %1254 = vmatmul.mubr.f32.gmra.mxu0 %v187
    %v1255 = vpop.f32.mrf.mxu0
    %v1256 = vadd.f32 %v1131, %v1255
    %v1257 = vpop.f32.mrf.mxu0
    %1258 = vmatprep.mubr.f32.mxu0 %v206
    %1259 = vmatmul.mubr.f32.gmra.mxu0 %v205
    %v1260 = vpop.f32.mrf.mxu0
    %v1261 = vadd.f32 %v1136, %v1260
    %v1262 = vpop.f32.mrf.mxu0
    %1263 = vmatprep.mubr.f32.mxu0 %v224
    %1264 = vmatmul.mubr.f32.gmra.mxu0 %v223
    %v1265 = vpop.f32.mrf.mxu0
    %v1266 = vadd.f32 %v1141, %v1265
    %v1267 = vpop.f32.mrf.mxu0
    %1268 = vdwg.mxu0
    %1269 = vmatprep.subr.mxu0 0.0
    %1270 = vmatpush1.msra.mxu0 %v438
    %1271 = vmatprep.subr.mxu0 0.0
    %1272 = vmatpush1.msra.mxu0 %v437
    %1273 = vmatprep.subr.mxu0 0.0
    %1274 = vmatpush1.msra.mxu0 %v436
    %1275 = vmatprep.subr.mxu0 0.0
    %1276 = vmatpush1.msra.mxu0 %v435
    %1277 = vmatprep.subr.mxu0 0.0
    %1278 = vmatpush1.msra.mxu0 %v434
    %1279 = vmatprep.subr.mxu0 0.0
    %1280 = vmatpush1.msra.mxu0 %v433
    %1281 = vmatprep.subr.mxu0 0.0
    %1282 = vmatpush1.msra.mxu0 %v432
    %1283 = vmatprep.subr.mxu0 0.0
    %1284 = vmatpush1.msra.mxu0 %v431
    %1285 = vmatprep.subr.mxu0 0.0
    %1286 = vmatpush1.msra.mxu0 %v430
    %1287 = vmatprep.subr.mxu0 0.0
    %1288 = vmatpush1.msra.mxu0 %v429
    %1289 = vmatprep.subr.mxu0 0.0
    %1290 = vmatpush1.msra.mxu0 %v428
    %1291 = vmatprep.subr.mxu0 0.0
    %1292 = vmatpush1.msra.mxu0 %v427
    %1293 = vmatprep.subr.mxu0 0.0
    %1294 = vmatpush1.msra.mxu0 %v426
    %1295 = vmatprep.subr.mxu0 0.0
    %1296 = vmatpush1.msra.mxu0 %v425
    %1297 = vmatprep.subr.mxu0 0.0
    %1298 = vmatpush1.msra.mxu0 %v424
    %1299 = vmatprep.subr.mxu0 0.0
    %1300 = vmatpush1.msra.mxu0 %v423
    %1301 = vmatprep.subr.mxu0 0.0
    %1302 = vmatpush2.msra.mxu0 %v454
    %1303 = vmatprep.subr.mxu0 0.0
    %1304 = vmatpush2.msra.mxu0 %v453
    %1305 = vmatprep.subr.mxu0 0.0
    %1306 = vmatpush2.msra.mxu0 %v452
    %1307 = vmatprep.subr.mxu0 0.0
    %1308 = vmatpush2.msra.mxu0 %v451
    %1309 = vmatprep.subr.mxu0 0.0
    %1310 = vmatpush2.msra.mxu0 %v450
    %1311 = vmatprep.subr.mxu0 0.0
    %1312 = vmatpush2.msra.mxu0 %v449
    %1313 = vmatprep.subr.mxu0 0.0
    %1314 = vmatpush2.msra.mxu0 %v448
    %1315 = vmatprep.subr.mxu0 0.0
    %1316 = vmatpush2.msra.mxu0 %v447
    %1317 = vmatprep.subr.mxu0 0.0
    %1318 = vmatpush2.msra.mxu0 %v446
    %1319 = vmatprep.subr.mxu0 0.0
    %1320 = vmatpush2.msra.mxu0 %v445
    %1321 = vmatprep.subr.mxu0 0.0
    %1322 = vmatpush2.msra.mxu0 %v444
    %1323 = vmatprep.subr.mxu0 0.0
    %1324 = vmatpush2.msra.mxu0 %v443
    %1325 = vmatprep.subr.mxu0 0.0
    %1326 = vmatpush2.msra.mxu0 %v442
    %1327 = vmatprep.subr.mxu0 0.0
    %1328 = vmatpush2.msra.mxu0 %v441
    %1329 = vmatprep.subr.mxu0 0.0
    %1330 = vmatpush2.msra.mxu0 %v440
    %1331 = vmatprep.subr.mxu0 0.0
    %1332 = vmatpush2.msra.mxu0 %v439
    %1333 = vmatprep.mubr.f32.mxu0 %v28
    %1334 = vmatmul.mubr.f32.gmra.mxu0 %v27
    %v1335 = vpop.f32.mrf.mxu0
    %v1336 = vadd.f32 %v1211, %v1335
    %v1337 = vpop.f32.mrf.mxu0
    %1338 = vmatprep.mubr.f32.mxu0 %v46
    %1339 = vmatmul.mubr.f32.gmra.mxu0 %v45
    %v1340 = vpop.f32.mrf.mxu0
    %v1341 = vadd.f32 %v1216, %v1340
    %v1342 = vpop.f32.mrf.mxu0
    %1343 = vmatprep.mubr.f32.mxu0 %v64
    %1344 = vmatmul.mubr.f32.gmra.mxu0 %v63
    %v1345 = vpop.f32.mrf.mxu0
    %v1346 = vadd.f32 %v1221, %v1345
    %v1347 = vpop.f32.mrf.mxu0
    %1348 = vmatprep.mubr.f32.mxu0 %v82
    %1349 = vmatmul.mubr.f32.gmra.mxu0 %v81
    %v1350 = vpop.f32.mrf.mxu0
    %v1351 = vadd.f32 %v1226, %v1350
    %v1352 = vpop.f32.mrf.mxu0
    %1353 = vmatprep.mubr.f32.mxu0 %v100
    %1354 = vmatmul.mubr.f32.gmra.mxu0 %v99
    %v1355 = vpop.f32.mrf.mxu0
    %v1356 = vadd.f32 %v1231, %v1355
    %v1357 = vpop.f32.mrf.mxu0
    %1358 = vmatprep.mubr.f32.mxu0 %v118
    %1359 = vmatmul.mubr.f32.gmra.mxu0 %v117
    %v1360 = vpop.f32.mrf.mxu0
    %v1361 = vadd.f32 %v1236, %v1360
    %v1362 = vpop.f32.mrf.mxu0
    %1363 = vmatprep.mubr.f32.mxu0 %v136
    %1364 = vmatmul.mubr.f32.gmra.mxu0 %v135
    %v1365 = vpop.f32.mrf.mxu0
    %v1366 = vadd.f32 %v1241, %v1365
    %v1367 = vpop.f32.mrf.mxu0
    %1368 = vmatprep.mubr.f32.mxu0 %v154
    %1369 = vmatmul.mubr.f32.gmra.mxu0 %v153
    %v1370 = vpop.f32.mrf.mxu0
    %v1371 = vadd.f32 %v1246, %v1370
    %v1372 = vpop.f32.mrf.mxu0
    %1373 = vmatprep.mubr.f32.mxu0 %v172
    %1374 = vmatmul.mubr.f32.gmra.mxu0 %v171
    %v1375 = vpop.f32.mrf.mxu0
    %v1376 = vadd.f32 %v1251, %v1375
    %v1377 = vpop.f32.mrf.mxu0
    %1378 = vmatprep.mubr.f32.mxu0 %v190
    %1379 = vmatmul.mubr.f32.gmra.mxu0 %v189
    %v1380 = vpop.f32.mrf.mxu0
    %v1381 = vadd.f32 %v1256, %v1380
    %v1382 = vpop.f32.mrf.mxu0
    %1383 = vmatprep.mubr.f32.mxu0 %v208
    %1384 = vmatmul.mubr.f32.gmra.mxu0 %v207
    %v1385 = vpop.f32.mrf.mxu0
    %v1386 = vadd.f32 %v1261, %v1385
    %v1387 = vpop.f32.mrf.mxu0
    %1388 = vmatprep.mubr.f32.mxu0 %v226
    %1389 = vmatmul.mubr.f32.gmra.mxu0 %v225
    %v1390 = vpop.f32.mrf.mxu0
    %v1391 = vadd.f32 %v1266, %v1390
    %v1392 = vpop.f32.mrf.mxu0
    %1393 = vdwg.mxu0
    %1394 = vmatprep.subr.mxu0 0.0
    %1395 = vmatpush1.msra.mxu0 %v470
    %1396 = vmatprep.subr.mxu0 0.0
    %1397 = vmatpush1.msra.mxu0 %v469
    %1398 = vmatprep.subr.mxu0 0.0
    %1399 = vmatpush1.msra.mxu0 %v468
    %1400 = vmatprep.subr.mxu0 0.0
    %1401 = vmatpush1.msra.mxu0 %v467
    %1402 = vmatprep.subr.mxu0 0.0
    %1403 = vmatpush1.msra.mxu0 %v466
    %1404 = vmatprep.subr.mxu0 0.0
    %1405 = vmatpush1.msra.mxu0 %v465
    %1406 = vmatprep.subr.mxu0 0.0
    %1407 = vmatpush1.msra.mxu0 %v464
    %1408 = vmatprep.subr.mxu0 0.0
    %1409 = vmatpush1.msra.mxu0 %v463
    %1410 = vmatprep.subr.mxu0 0.0
    %1411 = vmatpush1.msra.mxu0 %v462
    %1412 = vmatprep.subr.mxu0 0.0
    %1413 = vmatpush1.msra.mxu0 %v461
    %1414 = vmatprep.subr.mxu0 0.0
    %1415 = vmatpush1.msra.mxu0 %v460
    %1416 = vmatprep.subr.mxu0 0.0
    %1417 = vmatpush1.msra.mxu0 %v459
    %1418 = vmatprep.subr.mxu0 0.0
    %1419 = vmatpush1.msra.mxu0 %v458
    %1420 = vmatprep.subr.mxu0 0.0
    %1421 = vmatpush1.msra.mxu0 %v457
    %1422 = vmatprep.subr.mxu0 0.0
    %1423 = vmatpush1.msra.mxu0 %v456
    %1424 = vmatprep.subr.mxu0 0.0
    %1425 = vmatpush1.msra.mxu0 %v455
    %1426 = vmatprep.subr.mxu0 0.0
    %1427 = vmatpush2.msra.mxu0 %v486
    %1428 = vmatprep.subr.mxu0 0.0
    %1429 = vmatpush2.msra.mxu0 %v485
    %1430 = vmatprep.subr.mxu0 0.0
    %1431 = vmatpush2.msra.mxu0 %v484
    %1432 = vmatprep.subr.mxu0 0.0
    %1433 = vmatpush2.msra.mxu0 %v483
    %1434 = vmatprep.subr.mxu0 0.0
    %1435 = vmatpush2.msra.mxu0 %v482
    %1436 = vmatprep.subr.mxu0 0.0
    %1437 = vmatpush2.msra.mxu0 %v481
    %1438 = vmatprep.subr.mxu0 0.0
    %1439 = vmatpush2.msra.mxu0 %v480
    %1440 = vmatprep.subr.mxu0 0.0
    %1441 = vmatpush2.msra.mxu0 %v479
    %1442 = vmatprep.subr.mxu0 0.0
    %1443 = vmatpush2.msra.mxu0 %v478
    %1444 = vmatprep.subr.mxu0 0.0
    %1445 = vmatpush2.msra.mxu0 %v477
    %1446 = vmatprep.subr.mxu0 0.0
    %1447 = vmatpush2.msra.mxu0 %v476
    %1448 = vmatprep.subr.mxu0 0.0
    %1449 = vmatpush2.msra.mxu0 %v475
    %1450 = vmatprep.subr.mxu0 0.0
    %1451 = vmatpush2.msra.mxu0 %v474
    %1452 = vmatprep.subr.mxu0 0.0
    %1453 = vmatpush2.msra.mxu0 %v473
    %1454 = vmatprep.subr.mxu0 0.0
    %1455 = vmatpush2.msra.mxu0 %v472
    %1456 = vmatprep.subr.mxu0 0.0
    %1457 = vmatpush2.msra.mxu0 %v471
    %1458 = vmatprep.mubr.f32.mxu0 %v30
    %1459 = vmatmul.mubr.f32.gmra.mxu0 %v29
    %v1460 = vpop.f32.mrf.mxu0
    %v1461 = vadd.f32 %v1336, %v1460
    %v1462 = vpop.f32.mrf.mxu0
    %1463 = vmatprep.mubr.f32.mxu0 %v48
    %1464 = vmatmul.mubr.f32.gmra.mxu0 %v47
    %v1465 = vpop.f32.mrf.mxu0
    %v1466 = vadd.f32 %v1341, %v1465
    %v1467 = vpop.f32.mrf.mxu0
    %1468 = vmatprep.mubr.f32.mxu0 %v66
    %1469 = vmatmul.mubr.f32.gmra.mxu0 %v65
    %v1470 = vpop.f32.mrf.mxu0
    %v1471 = vadd.f32 %v1346, %v1470
    %v1472 = vpop.f32.mrf.mxu0
    %1473 = vmatprep.mubr.f32.mxu0 %v84
    %1474 = vmatmul.mubr.f32.gmra.mxu0 %v83
    %v1475 = vpop.f32.mrf.mxu0
    %v1476 = vadd.f32 %v1351, %v1475
    %v1477 = vpop.f32.mrf.mxu0
    %1478 = vmatprep.mubr.f32.mxu0 %v102
    %1479 = vmatmul.mubr.f32.gmra.mxu0 %v101
    %v1480 = vpop.f32.mrf.mxu0
    %v1481 = vadd.f32 %v1356, %v1480
    %v1482 = vpop.f32.mrf.mxu0
    %1483 = vmatprep.mubr.f32.mxu0 %v120
    %1484 = vmatmul.mubr.f32.gmra.mxu0 %v119
    %v1485 = vpop.f32.mrf.mxu0
    %v1486 = vadd.f32 %v1361, %v1485
    %v1487 = vpop.f32.mrf.mxu0
    %1488 = vmatprep.mubr.f32.mxu0 %v138
    %1489 = vmatmul.mubr.f32.gmra.mxu0 %v137
    %v1490 = vpop.f32.mrf.mxu0
    %v1491 = vadd.f32 %v1366, %v1490
    %v1492 = vpop.f32.mrf.mxu0
    %1493 = vmatprep.mubr.f32.mxu0 %v156
    %1494 = vmatmul.mubr.f32.gmra.mxu0 %v155
    %v1495 = vpop.f32.mrf.mxu0
    %v1496 = vadd.f32 %v1371, %v1495
    %v1497 = vpop.f32.mrf.mxu0
    %1498 = vmatprep.mubr.f32.mxu0 %v174
    %1499 = vmatmul.mubr.f32.gmra.mxu0 %v173
    %v1500 = vpop.f32.mrf.mxu0
    %v1501 = vadd.f32 %v1376, %v1500
    %v1502 = vpop.f32.mrf.mxu0
    %1503 = vmatprep.mubr.f32.mxu0 %v192
    %1504 = vmatmul.mubr.f32.gmra.mxu0 %v191
    %v1505 = vpop.f32.mrf.mxu0
    %v1506 = vadd.f32 %v1381, %v1505
    %v1507 = vpop.f32.mrf.mxu0
    %1508 = vmatprep.mubr.f32.mxu0 %v210
    %1509 = vmatmul.mubr.f32.gmra.mxu0 %v209
    %v1510 = vpop.f32.mrf.mxu0
    %v1511 = vadd.f32 %v1386, %v1510
    %v1512 = vpop.f32.mrf.mxu0
    %1513 = vmatprep.mubr.f32.mxu0 %v228
    %1514 = vmatmul.mubr.f32.gmra.mxu0 %v227
    %v1515 = vpop.f32.mrf.mxu0
    %v1516 = vadd.f32 %v1391, %v1515
    %v1517 = vpop.f32.mrf.mxu0
    %1518 = vdwg.mxu0
    %1519 = vmatprep.subr.mxu0 0.0
    %1520 = vmatpush1.msra.mxu0 %v502
    %1521 = vmatprep.subr.mxu0 0.0
    %1522 = vmatpush1.msra.mxu0 %v501
    %1523 = vmatprep.subr.mxu0 0.0
    %1524 = vmatpush1.msra.mxu0 %v500
    %1525 = vmatprep.subr.mxu0 0.0
    %1526 = vmatpush1.msra.mxu0 %v499
    %1527 = vmatprep.subr.mxu0 0.0
    %1528 = vmatpush1.msra.mxu0 %v498
    %1529 = vmatprep.subr.mxu0 0.0
    %1530 = vmatpush1.msra.mxu0 %v497
    %1531 = vmatprep.subr.mxu0 0.0
    %1532 = vmatpush1.msra.mxu0 %v496
    %1533 = vmatprep.subr.mxu0 0.0
    %1534 = vmatpush1.msra.mxu0 %v495
    %1535 = vmatprep.subr.mxu0 0.0
    %1536 = vmatpush1.msra.mxu0 %v494
    %1537 = vmatprep.subr.mxu0 0.0
    %1538 = vmatpush1.msra.mxu0 %v493
    %1539 = vmatprep.subr.mxu0 0.0
    %1540 = vmatpush1.msra.mxu0 %v492
    %1541 = vmatprep.subr.mxu0 0.0
    %1542 = vmatpush1.msra.mxu0 %v491
    %1543 = vmatprep.subr.mxu0 0.0
    %1544 = vmatpush1.msra.mxu0 %v490
    %1545 = vmatprep.subr.mxu0 0.0
    %1546 = vmatpush1.msra.mxu0 %v489
    %1547 = vmatprep.subr.mxu0 0.0
    %1548 = vmatpush1.msra.mxu0 %v488
    %1549 = vmatprep.subr.mxu0 0.0
    %1550 = vmatpush1.msra.mxu0 %v487
    %1551 = vmatprep.subr.mxu0 0.0
    %1552 = vmatpush2.msra.mxu0 %v518
    %1553 = vmatprep.subr.mxu0 0.0
    %1554 = vmatpush2.msra.mxu0 %v517
    %1555 = vmatprep.subr.mxu0 0.0
    %1556 = vmatpush2.msra.mxu0 %v516
    %1557 = vmatprep.subr.mxu0 0.0
    %1558 = vmatpush2.msra.mxu0 %v515
    %1559 = vmatprep.subr.mxu0 0.0
    %1560 = vmatpush2.msra.mxu0 %v514
    %1561 = vmatprep.subr.mxu0 0.0
    %1562 = vmatpush2.msra.mxu0 %v513
    %1563 = vmatprep.subr.mxu0 0.0
    %1564 = vmatpush2.msra.mxu0 %v512
    %1565 = vmatprep.subr.mxu0 0.0
    %1566 = vmatpush2.msra.mxu0 %v511
    %1567 = vmatprep.subr.mxu0 0.0
    %1568 = vmatpush2.msra.mxu0 %v510
    %1569 = vmatprep.subr.mxu0 0.0
    %1570 = vmatpush2.msra.mxu0 %v509
    %1571 = vmatprep.subr.mxu0 0.0
    %1572 = vmatpush2.msra.mxu0 %v508
    %1573 = vmatprep.subr.mxu0 0.0
    %1574 = vmatpush2.msra.mxu0 %v507
    %1575 = vmatprep.subr.mxu0 0.0
    %1576 = vmatpush2.msra.mxu0 %v506
    %1577 = vmatprep.subr.mxu0 0.0
    %1578 = vmatpush2.msra.mxu0 %v505
    %1579 = vmatprep.subr.mxu0 0.0
    %1580 = vmatpush2.msra.mxu0 %v504
    %1581 = vmatprep.subr.mxu0 0.0
    %1582 = vmatpush2.msra.mxu0 %v503
    %1583 = vmatprep.mubr.f32.mxu0 %v32
    %1584 = vmatmul.mubr.f32.gmra.mxu0 %v31
    %v1585 = vpop.f32.mrf.mxu0
    %v1586 = vadd.f32 %v1461, %v1585
    %v1587 = vpop.f32.mrf.mxu0
    %1588 = vmatprep.mubr.f32.mxu0 %v50
    %1589 = vmatmul.mubr.f32.gmra.mxu0 %v49
    %v1590 = vpop.f32.mrf.mxu0
    %v1591 = vadd.f32 %v1466, %v1590
    %v1592 = vpop.f32.mrf.mxu0
    %1593 = vmatprep.mubr.f32.mxu0 %v68
    %1594 = vmatmul.mubr.f32.gmra.mxu0 %v67
    %v1595 = vpop.f32.mrf.mxu0
    %v1596 = vadd.f32 %v1471, %v1595
    %v1597 = vpop.f32.mrf.mxu0
    %1598 = vmatprep.mubr.f32.mxu0 %v86
    %1599 = vmatmul.mubr.f32.gmra.mxu0 %v85
    %v1600 = vpop.f32.mrf.mxu0
    %v1601 = vadd.f32 %v1476, %v1600
    %v1602 = vpop.f32.mrf.mxu0
    %1603 = vmatprep.mubr.f32.mxu0 %v104
    %1604 = vmatmul.mubr.f32.gmra.mxu0 %v103
    %v1605 = vpop.f32.mrf.mxu0
    %v1606 = vadd.f32 %v1481, %v1605
    %v1607 = vpop.f32.mrf.mxu0
    %1608 = vmatprep.mubr.f32.mxu0 %v122
    %1609 = vmatmul.mubr.f32.gmra.mxu0 %v121
    %v1610 = vpop.f32.mrf.mxu0
    %v1611 = vadd.f32 %v1486, %v1610
    %v1612 = vpop.f32.mrf.mxu0
    %1613 = vmatprep.mubr.f32.mxu0 %v140
    %1614 = vmatmul.mubr.f32.gmra.mxu0 %v139
    %v1615 = vpop.f32.mrf.mxu0
    %v1616 = vadd.f32 %v1491, %v1615
    %v1617 = vpop.f32.mrf.mxu0
    %1618 = vmatprep.mubr.f32.mxu0 %v158
    %1619 = vmatmul.mubr.f32.gmra.mxu0 %v157
    %v1620 = vpop.f32.mrf.mxu0
    %v1621 = vadd.f32 %v1496, %v1620
    %v1622 = vpop.f32.mrf.mxu0
    %1623 = vmatprep.mubr.f32.mxu0 %v176
    %1624 = vmatmul.mubr.f32.gmra.mxu0 %v175
    %v1625 = vpop.f32.mrf.mxu0
    %v1626 = vadd.f32 %v1501, %v1625
    %v1627 = vpop.f32.mrf.mxu0
    %1628 = vmatprep.mubr.f32.mxu0 %v194
    %1629 = vmatmul.mubr.f32.gmra.mxu0 %v193
    %v1630 = vpop.f32.mrf.mxu0
    %v1631 = vadd.f32 %v1506, %v1630
    %v1632 = vpop.f32.mrf.mxu0
    %1633 = vmatprep.mubr.f32.mxu0 %v212
    %1634 = vmatmul.mubr.f32.gmra.mxu0 %v211
    %v1635 = vpop.f32.mrf.mxu0
    %v1636 = vadd.f32 %v1511, %v1635
    %v1637 = vpop.f32.mrf.mxu0
    %1638 = vmatprep.mubr.f32.mxu0 %v230
    %1639 = vmatmul.mubr.f32.gmra.mxu0 %v229
    %v1640 = vpop.f32.mrf.mxu0
    %v1641 = vadd.f32 %v1516, %v1640
    %v1642 = vpop.f32.mrf.mxu0
    %1643 = vdwg.mxu0
    %vm1644 = vcmask 400384
    %v1645 = vsel %vm1644, %v1586, 0.0
    %1646 = vadd.xlane.f32.xlu0 %v1645
    %v1647 = vpop.xlane.xlu0 %1646
    %v1648 = vsel %vm1644, %v1591, 0.0
    %1649 = vadd.xlane.f32.xlu0 %v1648
    %v1650 = vpop.xlane.xlu0 %1649
    %v1651 = vsel %vm1644, %v1596, 0.0
    %1652 = vadd.xlane.f32.xlu0 %v1651
    %v1653 = vpop.xlane.xlu0 %1652
    %v1654 = vsel %vm1644, %v1601, 0.0
    %1655 = vadd.xlane.f32.xlu0 %v1654
    %v1656 = vpop.xlane.xlu0 %1655
    %v1657 = vsel %vm1644, %v1606, 0.0
    %1658 = vadd.xlane.f32.xlu0 %v1657
    %v1659 = vpop.xlane.xlu0 %1658
    %v1660 = vsel %vm1644, %v1611, 0.0
    %1661 = vadd.xlane.f32.xlu0 %v1660
    %v1662 = vpop.xlane.xlu0 %1661
    %v1663 = vsel %vm1644, %v1616, 0.0
    %1664 = vadd.xlane.f32.xlu0 %v1663
    %v1665 = vpop.xlane.xlu0 %1664
    %v1666 = vsel %vm1644, %v1621, 0.0
    %1667 = vadd.xlane.f32.xlu0 %v1666
    %v1668 = vpop.xlane.xlu0 %1667
    %v1669 = vsel %vm1644, %v1626, 0.0
    %1670 = vadd.xlane.f32.xlu0 %v1669
    %v1671 = vpop.xlane.xlu0 %1670
    %v1672 = vsel %vm1644, %v1631, 0.0
    %1673 = vadd.xlane.f32.xlu0 %v1672
    %v1674 = vpop.xlane.xlu0 %1673
    %v1675 = vsel %vm1644, %v1636, 0.0
    %1676 = vadd.xlane.f32.xlu0 %v1675
    %v1677 = vpop.xlane.xlu0 %1676
    %v1678 = vsel %vm1644, %v1641, 0.0
    %1679 = vadd.xlane.f32.xlu0 %v1678
    %v1680 = vpop.xlane.xlu0 %1679
    %v1681 = vmul.f32 %v1647, 0.020408163
    %v1682 = vmul.f32 %v1650, 0.020408163
    %v1683 = vmul.f32 %v1653, 0.020408163
    %v1684 = vmul.f32 %v1656, 0.020408163
    %v1685 = vmul.f32 %v1659, 0.020408163
    %v1686 = vmul.f32 %v1662, 0.020408163
    %v1687 = vmul.f32 %v1665, 0.020408163
    %v1688 = vmul.f32 %v1668, 0.020408163
    %v1689 = vmul.f32 %v1671, 0.020408163
    %v1690 = vmul.f32 %v1674, 0.020408163
    %v1691 = vmul.f32 %v1677, 0.020408163
    %v1692 = vmul.f32 %v1680, 0.020408163
    %v1693 = vld [vmem:[%s2] sm:$0x1]
    %v1695 = vlaneseq
    %v1696 = vshrl.u32 %v1695, 7
    %v1697 = vsub.s32 0, %v1696
    %v1698 = vrot.slane %v1693, %v1697
    %1700 = vbcast.lane.b32.xlu0 %v1698, 256
    %v1701 = vpop.permute.xlu0 %1700
    %s1703 = sor.u32 256, 8
    %1704 = vbcast.lane.b32.xlu0 %v1698, %s1703
    %v1705 = vpop.permute.xlu0 %1704
    %s1707 = sor.u32 256, 16
    %1708 = vbcast.lane.b32.xlu0 %v1698, %s1707
    %v1709 = vpop.permute.xlu0 %1708
    %s1711 = sor.u32 256, 24
    %1712 = vbcast.lane.b32.xlu0 %v1698, %s1711
    %v1713 = vpop.permute.xlu0 %1712
    %s1715 = sor.u32 256, 32
    %1716 = vbcast.lane.b32.xlu0 %v1698, %s1715
    %v1717 = vpop.permute.xlu0 %1716
    %s1719 = sor.u32 256, 40
    %1720 = vbcast.lane.b32.xlu0 %v1698, %s1719
    %v1721 = vpop.permute.xlu0 %1720
    %s1723 = sor.u32 256, 48
    %1724 = vbcast.lane.b32.xlu0 %v1698, %s1723
    %v1725 = vpop.permute.xlu0 %1724
    %s1727 = sor.u32 256, 56
    %1728 = vbcast.lane.b32.xlu0 %v1698, %s1727
    %v1729 = vpop.permute.xlu0 %1728
    %s1731 = sor.u32 256, 64
    %1732 = vbcast.lane.b32.xlu0 %v1698, %s1731
    %v1733 = vpop.permute.xlu0 %1732
    %s1735 = sor.u32 256, 72
    %1736 = vbcast.lane.b32.xlu0 %v1698, %s1735
    %v1737 = vpop.permute.xlu0 %1736
    %s1739 = sor.u32 256, 80
    %1740 = vbcast.lane.b32.xlu0 %v1698, %s1739
    %v1741 = vpop.permute.xlu0 %1740
    %s1743 = sor.u32 256, 88
    %1744 = vbcast.lane.b32.xlu0 %v1698, %s1743
    %v1745 = vpop.permute.xlu0 %1744
    %v1758 = vadd.f32 %v1681, %v1701
    %v1759 = vadd.f32 %v1682, %v1705
    %v1760 = vadd.f32 %v1683, %v1709
    %v1761 = vadd.f32 %v1684, %v1713
    %v1762 = vadd.f32 %v1685, %v1717
    %v1763 = vadd.f32 %v1686, %v1721
    %v1764 = vadd.f32 %v1687, %v1725
    %v1765 = vadd.f32 %v1688, %v1729
    %v1766 = vadd.f32 %v1689, %v1733
    %v1767 = vadd.f32 %v1690, %v1737
    %v1768 = vadd.f32 %v1691, %v1741
    %v1769 = vadd.f32 %v1692, %v1745
    %1782 = vset.pattern.permute.xlu0 0
    %1783 = vperm.xlu0 %1782, %v1758
    %v1784 = vpop.permute.xlu0 %1783
    %1785 = vset.pattern.permute.xlu0 0
    %1786 = vperm.xlu0 %1785, %v1759
    %v1787 = vpop.permute.xlu0 %1786
    %1788 = vset.pattern.permute.xlu0 0
    %1789 = vperm.xlu0 %1788, %v1760
    %v1790 = vpop.permute.xlu0 %1789
    %1791 = vset.pattern.permute.xlu0 0
    %1792 = vperm.xlu0 %1791, %v1761
    %v1793 = vpop.permute.xlu0 %1792
    %1794 = vset.pattern.permute.xlu0 0
    %1795 = vperm.xlu0 %1794, %v1762
    %v1796 = vpop.permute.xlu0 %1795
    %1797 = vset.pattern.permute.xlu0 0
    %1798 = vperm.xlu0 %1797, %v1763
    %v1799 = vpop.permute.xlu0 %1798
    %1800 = vset.pattern.permute.xlu0 0
    %1801 = vperm.xlu0 %1800, %v1764
    %v1802 = vpop.permute.xlu0 %1801
    %1803 = vset.pattern.permute.xlu0 0
    %1804 = vperm.xlu0 %1803, %v1765
    %v1805 = vpop.permute.xlu0 %1804
    %1806 = vset.pattern.permute.xlu0 0
    %1807 = vperm.xlu0 %1806, %v1766
    %v1808 = vpop.permute.xlu0 %1807
    %1809 = vset.pattern.permute.xlu0 0
    %1810 = vperm.xlu0 %1809, %v1767
    %v1811 = vpop.permute.xlu0 %1810
    %1812 = vset.pattern.permute.xlu0 0
    %1813 = vperm.xlu0 %1812, %v1768
    %v1814 = vpop.permute.xlu0 %1813
    %1815 = vset.pattern.permute.xlu0 0
    %1816 = vperm.xlu0 %1815, %v1769
    %v1817 = vpop.permute.xlu0 %1816
    %v1818 = vlaneseq
    %v1819 = vand.u32 %v1818, 127
    %v1820 = vlaneseq
    %v1821 = vshrl.u32 %v1820, 7
    %v1822 = vsub.s32 %v1819, %v1821
    %v1823 = vrot.slane %v1784, %v1822
    %v1824 = vadd.s32 %v1819, 4294967288
    %v1825 = vlaneseq
    %v1826 = vshrl.u32 %v1825, 7
    %v1827 = vsub.s32 %v1824, %v1826
    %v1828 = vrot.slane %v1787, %v1827
    %vm1829 = vcmask 130112
    %v1830 = vsel %vm1829, %v1828, %v1823
    %v1831 = vadd.s32 %v1819, 4294967280
    %v1832 = vlaneseq
    %v1833 = vshrl.u32 %v1832, 7
    %v1834 = vsub.s32 %v1831, %v1833
    %v1835 = vrot.slane %v1790, %v1834
    %vm1836 = vcmask 195712
    %v1837 = vsel %vm1836, %v1835, %v1830
    %v1838 = vadd.s32 %v1819, 4294967272
    %v1839 = vlaneseq
    %v1840 = vshrl.u32 %v1839, 7
    %v1841 = vsub.s32 %v1838, %v1840
    %v1842 = vrot.slane %v1793, %v1841
    %vm1843 = vcmask 261312
    %v1844 = vsel %vm1843, %v1842, %v1837
    %v1845 = vadd.s32 %v1819, 4294967264
    %v1846 = vlaneseq
    %v1847 = vshrl.u32 %v1846, 7
    %v1848 = vsub.s32 %v1845, %v1847
    %v1849 = vrot.slane %v1796, %v1848
    %vm1850 = vcmask 326912
    %v1851 = vsel %vm1850, %v1849, %v1844
    %v1852 = vadd.s32 %v1819, 4294967256
    %v1853 = vlaneseq
    %v1854 = vshrl.u32 %v1853, 7
    %v1855 = vsub.s32 %v1852, %v1854
    %v1856 = vrot.slane %v1799, %v1855
    %vm1857 = vcmask 392512
    %v1858 = vsel %vm1857, %v1856, %v1851
    %v1859 = vadd.s32 %v1819, 4294967248
    %v1860 = vlaneseq
    %v1861 = vshrl.u32 %v1860, 7
    %v1862 = vsub.s32 %v1859, %v1861
    %v1863 = vrot.slane %v1802, %v1862
    %vm1864 = vcmask 458112
    %v1865 = vsel %vm1864, %v1863, %v1858
    %v1866 = vadd.s32 %v1819, 4294967240
    %v1867 = vlaneseq
    %v1868 = vshrl.u32 %v1867, 7
    %v1869 = vsub.s32 %v1866, %v1868
    %v1870 = vrot.slane %v1805, %v1869
    %vm1871 = vcmask 523712
    %v1872 = vsel %vm1871, %v1870, %v1865
    %v1873 = vadd.s32 %v1819, 4294967232
    %v1874 = vlaneseq
    %v1875 = vshrl.u32 %v1874, 7
    %v1876 = vsub.s32 %v1873, %v1875
    %v1877 = vrot.slane %v1808, %v1876
    %vm1878 = vcmask 589312
    %v1879 = vsel %vm1878, %v1877, %v1872
    %v1880 = vadd.s32 %v1819, 4294967224
    %v1881 = vlaneseq
    %v1882 = vshrl.u32 %v1881, 7
    %v1883 = vsub.s32 %v1880, %v1882
    %v1884 = vrot.slane %v1811, %v1883
    %vm1885 = vcmask 654912
    %v1886 = vsel %vm1885, %v1884, %v1879
    %v1887 = vadd.s32 %v1819, 4294967216
    %v1888 = vlaneseq
    %v1889 = vshrl.u32 %v1888, 7
    %v1890 = vsub.s32 %v1887, %v1889
    %v1891 = vrot.slane %v1814, %v1890
    %vm1892 = vcmask 720512
    %v1893 = vsel %vm1892, %v1891, %v1886
    %v1894 = vadd.s32 %v1819, 4294967208
    %v1895 = vlaneseq
    %v1896 = vshrl.u32 %v1895, 7
    %v1897 = vsub.s32 %v1894, %v1896
    %v1898 = vrot.slane %v1817, %v1897
    %vm1899 = vcmask 786112
    %v1900 = vsel %vm1899, %v1898, %v1893
    %vm1902 = vcmask 778240
    %1903 = vst.msk [vmem:[#allocation2] sm:$0x1] %vm1902, %v1900
    // Predicated region
    $region14: #{tpu_custom_call.1} parent=1 // pred_check
      _
    $region15: #{tpu_custom_call.1} parent=1 // pred_check_branch
      %1905 = sbr.rel (0) target = $region17
    $region16: #{tpu_custom_call.1} parent=1 // pred_region
      %s1907 = ssub.s32 16, 16
      %1908 = vsyncadd [#allocation3], %s1907
      %s1910 = sshll.u32 [#allocation2], 4
      %s1911 = int_to_ptr.vmem [resolvable:$true] %s1910
      %1913 = dma.vmem_to_hbm [thread:$0]  %s1911, 16, %s3, [#allocation3]
    $region17: #{tpu_custom_call.1} parent=1 // pred_fallthru
      _
    // Predicated region
    $region18: #{tpu_custom_call.1} parent=1 // pred_check
      _
    $region19: #{tpu_custom_call.1} parent=1 // pred_check_branch
      %1915 = sbr.rel (0) target = $region21
    $region20: #{tpu_custom_call.1} parent=1 // pred_region
      %1916 = dma.done [#allocation3], 16
    $region21: #{tpu_custom_call.1} parent=1 // pred_fallthru
      _
    %1917 = vsyncpa [#allocation3], 1

</llo_original>
